<compile_context>
chip_gen: v7x
topology: tpu7x:2x2x1
jax: 0.10.0
libtpu: 0.0.40
codegen_flags: <defaults>
</compile_context>

<pallas_src>
import functools

import jax
import jax.numpy as jnp
from jax.experimental import pallas as pl
from jax.experimental.pallas import tpu as pltpu


def _round_up(x, m):
    return (x + m - 1) // m * m


# ------------------------------ Pallas kernel ------------------------------

def _conv3bn_kernel(x_ref, w_ref, b_ref, o_ref, xpad_ref, *, H, W, CINP, KP, WO):
    """Fused 3x3 conv (padding=1) + bias + ReLU for one image.

    x_ref   : (1, H, W, CINP)        bf16 input block (one image)
    w_ref   : (KP, COUTP)            bf16 weights, tap-major (dy, dx, cin), zero-padded K
    b_ref   : (1, COUTP)             f32 bias (zero-padded)
    o_ref   : (1, H*W, COUTP)        f32 output, lane-dense (COUTP multiple of 128)
    xpad_ref: (H+2, W_PAD, CINP)     bf16 scratch, zero halo, W axis padded to multiple of 8
    """
    COUTP = o_ref.shape[-1]
    M = H * W
    dt = xpad_ref.dtype

    # ---- fused zero padding: refresh only the halo ring (interior fully overwritten) ----
    zrow = jnp.zeros((1, W + 2, CINP), dtype=dt)
    xpad_ref[0:1, WO - 1:WO + W + 1, :] = zrow                 # top halo row
    xpad_ref[H + 1:H + 2, WO - 1:WO + W + 1, :] = zrow         # bottom halo row
    zcol = jnp.zeros((H, 1, CINP), dtype=dt)
    xpad_ref[1:H + 1, WO - 1:WO, :] = zcol                     # left halo column
    xpad_ref[1:H + 1, WO + W:WO + W + 1, :] = zcol             # right halo column
    # interior write at a sublane-aligned (multiple-of-8) W offset
    xpad_ref[1:H + 1, WO:WO + W, :] = x_ref[0]

    # ---- im2col in registers: 9 shifted taps concatenated along the lane axis ----
    pieces = []
    for dy in range(3):
        for dx in range(3):
            tap = xpad_ref[dy:dy + H, WO - 1 + dx:WO - 1 + dx + W, :]   # (H, W, CINP)
            pieces.append(tap.reshape(M, CINP))
    if KP > 9 * CINP:
        pieces.append(jnp.zeros((M, KP - 9 * CINP), dtype=dt))         # zero K padding
    col = jnp.concatenate(pieces, axis=-1)                              # (M, KP) bf16

    # ---- single MXU matmul, f32 accumulation; bias + ReLU fused in f32 ----
    acc = jnp.dot(col, w_ref[...], preferred_element_type=jnp.float32)  # (M, COUTP)
    acc = jnp.maximum(acc + b_ref[...], 0.0)
    o_ref[0] = acc.astype(o_ref.dtype)


# --------------------------------- wrapper ---------------------------------

def conv3bn_forward(x_nchw, weight, bias):
    """Conv3BN forward (bn=False).

    x_nchw : (N, Cin, H, W) f32    (PyTorch layout)
    weight : (Cout, Cin, 3, 3) f32 (PyTorch Conv2d layout, cross-correlation)
    bias   : (Cout,) f32
    returns: (N, Cout, H, W) f32
    """
    N, Cin, H, W = x_nchw.shape
    Cout = weight.shape[0]

    LANES = 128
    CINP = _round_up(max(Cin, 8), 8)          # pad tiny channel counts
    KP = _round_up(9 * CINP, LANES)           # contraction dim padded to 128
    COUTP = _round_up(Cout, LANES)            # lane-dense output
    WO = 8                                    # sublane-aligned interior offset in scratch
    W_PAD = _round_up(WO + W + 1, 8)          # scratch W axis multiple of 8

    # NHWC activations, bf16 MXU operands (half the activation DMA bytes)
    x = jnp.transpose(x_nchw, (0, 2, 3, 1))
    if CINP > Cin:
        x = jnp.pad(x, ((0, 0), (0, 0), (0, 0), (0, CINP - Cin)))
    x_bf = x.astype(jnp.bfloat16)

    # (dy, dx, cin)-major weight matrix, zero-padded to (KP, COUTP)
    w = jnp.transpose(weight, (2, 3, 1, 0))                     # (3, 3, Cin, Cout)
    w = jnp.pad(w, ((0, 0), (0, 0), (0, CINP - Cin), (0, COUTP - Cout)))
    w = w.reshape(9 * CINP, COUTP)
    w = jnp.pad(w, ((0, KP - 9 * CINP), (0, 0)))
    w_bf = w.astype(jnp.bfloat16)

    b2 = jnp.pad(bias, (0, COUTP - Cout)).reshape(1, COUTP).astype(jnp.float32)

    M = H * W

    # explicit VMEM budget: double-buffered blocks + halo scratch + headroom, clamped to
    # the v7x 64 MiB physical VMEM (generous on v5e/v6e's 128 MiB).
    blk_bytes = (M * CINP * 2           # x block (bf16)
                 + KP * COUTP * 2       # weights (bf16)
                 + COUTP * 4            # bias (f32)
                 + M * COUTP * 4)       # output block (f32)
    scratch_bytes = (H + 2) * W_PAD * CINP * 2
    vmem_limit = int(min(64 * 1024 * 1024,
                         max(8 * 1024 * 1024,
                             2 * blk_bytes + scratch_bytes + (4 << 20))))

    kernel = functools.partial(_conv3bn_kernel, H=H, W=W, CINP=CINP, KP=KP, WO=WO)

    out = pl.pallas_call(
        kernel,
        out_shape=jax.ShapeDtypeStruct((N, M, COUTP), jnp.float32),
        grid=(N,),                                             # pipelined + megacore-split
        in_specs=[
            pl.BlockSpec((1, H, W, CINP), lambda n: (n, 0, 0, 0)),
            pl.BlockSpec((KP, COUTP), lambda n: (0, 0)),
            pl.BlockSpec((1, COUTP), lambda n: (0, 0)),
        ],
        out_specs=pl.BlockSpec((1, M, COUTP), lambda n: (n, 0, 0)),
        scratch_shapes=[pltpu.VMEM((H + 2, W_PAD, CINP), jnp.bfloat16)],
        compiler_params=pltpu.CompilerParams(
            dimension_semantics=("parallel",),                 # v7x: 2 TCs split the batch
            vmem_limit_bytes=vmem_limit,
        ),
    )(x_bf, w_bf, b2)

    out = out.reshape(N, H, W, COUTP)[..., :Cout]              # drop zero channel padding
    return jnp.transpose(out, (0, 3, 1, 2))                    # back to NCHW


# ----------------------------------- main -----------------------------------

if __name__ == "__main__":
    key = jax.random.PRNGKey(0)
    kx, kw, kb = jax.random.split(key, 3)

    N, Cin, H, W, Cout = 2, 4, 16, 16, 32
    x = jax.random.normal(kx, (N, Cin, H, W), jnp.float32)
    weight = jax.random.normal(kw, (Cout, Cin, 3, 3), jnp.float32) * jnp.sqrt(2.0 / (9 * Cin))
    bias = jax.random.normal(kb, (Cout,), jnp.float32) * 0.01

    fwd = jax.jit(conv3bn_forward)
    out = fwd(x, weight, bias)
    jax.block_until_ready(out)

    assert out.shape == (N, Cout, H, W)
    assert bool(jnp.all(out >= 0.0))                            # ReLU

    # f32 XLA reference (cross-correlation, padding=1) + bias + ReLU
    ref = jax.lax.conv_general_dilated(
        x, weight, window_strides=(1, 1), padding=((1, 1), (1, 1)),
        dimension_numbers=("NCHW", "OIHW", "NCHW"))
    ref = jnp.maximum(ref + bias.reshape(1, Cout, 1, 1), 0.0)
    max_err = float(jnp.max(jnp.abs(out - ref)))
    assert max_err < 1e-1, f"max abs err {max_err}"             # bf16 MXU operands vs f32 ref

    print("KERNEL_OK")
</pallas_src>

<mosaic_0001>
module attributes {stable_mosaic.version = 11 : i64} {
  func.func @_conv3bn_kernel(%arg0: i32, %arg1: memref<1x16x16x8xbf16, #tpu.memory_space<vmem>>, %arg2: memref<128x128xbf16, #tpu.memory_space<vmem>>, %arg3: memref<1x128xf32, #tpu.memory_space<vmem>>, %arg4: memref<1x256x128xf32, #tpu.memory_space<vmem>>, %arg5: memref<18x32x8xbf16, #tpu.memory_space<vmem>>) attributes {dimension_semantics = [#tpu.dimension_semantics<parallel>], iteration_bounds = array<i64: 2>, scalar_prefetch = 0 : i64, scratch_operands = 1 : i64, tpu.core_type = #tpu.core_type<tc>, window_params = [{transform_indices = @transform_0, window_bounds = array<i64: 1, 16, 16, 8>}, {pipeline_mode = #tpu.pipeline_mode<synchronous>, transform_indices = @transform_1, window_bounds = array<i64: 128, 128>}, {pipeline_mode = #tpu.pipeline_mode<synchronous>, transform_indices = @transform_2, window_bounds = array<i64: 1, 128>}, {transform_indices = @transform_3, window_bounds = array<i64: 1, 256, 128>}]} {
    %cst = arith.constant 0.000000e+00 : bf16
    %0 = vector.broadcast %cst : bf16 to vector<1x18x8xbf16>
    %c0 = arith.constant 0 : index
    %c7 = arith.constant 7 : index
    %c0_0 = arith.constant 0 : index
    %1 = vector.load %arg5[%c0, %c7, %c0_0] : memref<18x32x8xbf16, #tpu.memory_space<vmem>>, vector<1x18x8xbf16>
    tpu.vector_store %arg5[%c0, %c7, %c0_0], %0 {strides = array<i32>} : memref<18x32x8xbf16, #tpu.memory_space<vmem>>, vector<1x18x8xbf16>,
    %c17 = arith.constant 17 : index
    %c7_1 = arith.constant 7 : index
    %c0_2 = arith.constant 0 : index
    %2 = vector.load %arg5[%c17, %c7_1, %c0_2] : memref<18x32x8xbf16, #tpu.memory_space<vmem>>, vector<1x18x8xbf16>
    tpu.vector_store %arg5[%c17, %c7_1, %c0_2], %0 {strides = array<i32>} : memref<18x32x8xbf16, #tpu.memory_space<vmem>>, vector<1x18x8xbf16>,
    %cst_3 = arith.constant 0.000000e+00 : bf16
    %3 = vector.broadcast %cst_3 : bf16 to vector<16x1x8xbf16>
    %c1 = arith.constant 1 : index
    %c7_4 = arith.constant 7 : index
    %c0_5 = arith.constant 0 : index
    %4 = vector.load %arg5[%c1, %c7_4, %c0_5] : memref<18x32x8xbf16, #tpu.memory_space<vmem>>, vector<16x1x8xbf16>
    tpu.vector_store %arg5[%c1, %c7_4, %c0_5], %3 {strides = array<i32>} : memref<18x32x8xbf16, #tpu.memory_space<vmem>>, vector<16x1x8xbf16>,
    %c1_6 = arith.constant 1 : index
    %c24 = arith.constant 24 : index
    %c0_7 = arith.constant 0 : index
    %5 = vector.load %arg5[%c1_6, %c24, %c0_7] : memref<18x32x8xbf16, #tpu.memory_space<vmem>>, vector<16x1x8xbf16>
    tpu.vector_store %arg5[%c1_6, %c24, %c0_7], %3 {strides = array<i32>} : memref<18x32x8xbf16, #tpu.memory_space<vmem>>, vector<16x1x8xbf16>,
    %c0_8 = arith.constant 0 : index
    %c0_9 = arith.constant 0 : index
    %c0_10 = arith.constant 0 : index
    %c0_11 = arith.constant 0 : index
    %6 = vector.load %arg1[%c0_8, %c0_9, %c0_10, %c0_11] : memref<1x16x16x8xbf16, #tpu.memory_space<vmem>>, vector<1x16x16x8xbf16>
    %7 = vector.shape_cast %6 : vector<1x16x16x8xbf16> to vector<16x16x8xbf16>
    %c1_12 = arith.constant 1 : index
    %c8 = arith.constant 8 : index
    %c0_13 = arith.constant 0 : index
    %8 = vector.load %arg5[%c1_12, %c8, %c0_13] : memref<18x32x8xbf16, #tpu.memory_space<vmem>>, vector<16x16x8xbf16>
    tpu.vector_store %arg5[%c1_12, %c8, %c0_13], %7 {strides = array<i32>} : memref<18x32x8xbf16, #tpu.memory_space<vmem>>, vector<16x16x8xbf16>,
    %c0_14 = arith.constant 0 : index
    %c7_15 = arith.constant 7 : index
    %c0_16 = arith.constant 0 : index
    %9 = vector.load %arg5[%c0_14, %c7_15, %c0_16] : memref<18x32x8xbf16, #tpu.memory_space<vmem>>, vector<16x16x8xbf16>
    %10 = vector.shape_cast %9 : vector<16x16x8xbf16> to vector<256x8xbf16>
    %c0_17 = arith.constant 0 : index
    %c8_18 = arith.constant 8 : index
    %c0_19 = arith.constant 0 : index
    %11 = vector.load %arg5[%c0_17, %c8_18, %c0_19] : memref<18x32x8xbf16, #tpu.memory_space<vmem>>, vector<16x16x8xbf16>
    %12 = vector.shape_cast %11 : vector<16x16x8xbf16> to vector<256x8xbf16>
    %c0_20 = arith.constant 0 : index
    %c9 = arith.constant 9 : index
    %c0_21 = arith.constant 0 : index
    %13 = vector.load %arg5[%c0_20, %c9, %c0_21] : memref<18x32x8xbf16, #tpu.memory_space<vmem>>, vector<16x16x8xbf16>
    %14 = vector.shape_cast %13 : vector<16x16x8xbf16> to vector<256x8xbf16>
    %c1_22 = arith.constant 1 : index
    %c7_23 = arith.constant 7 : index
    %c0_24 = arith.constant 0 : index
    %15 = vector.load %arg5[%c1_22, %c7_23, %c0_24] : memref<18x32x8xbf16, #tpu.memory_space<vmem>>, vector<16x16x8xbf16>
    %16 = vector.shape_cast %15 : vector<16x16x8xbf16> to vector<256x8xbf16>
    %c1_25 = arith.constant 1 : index
    %c8_26 = arith.constant 8 : index
    %c0_27 = arith.constant 0 : index
    %17 = vector.load %arg5[%c1_25, %c8_26, %c0_27] : memref<18x32x8xbf16, #tpu.memory_space<vmem>>, vector<16x16x8xbf16>
    %18 = vector.shape_cast %17 : vector<16x16x8xbf16> to vector<256x8xbf16>
    %c1_28 = arith.constant 1 : index
    %c9_29 = arith.constant 9 : index
    %c0_30 = arith.constant 0 : index
    %19 = vector.load %arg5[%c1_28, %c9_29, %c0_30] : memref<18x32x8xbf16, #tpu.memory_space<vmem>>, vector<16x16x8xbf16>
    %20 = vector.shape_cast %19 : vector<16x16x8xbf16> to vector<256x8xbf16>
    %c2 = arith.constant 2 : index
    %c7_31 = arith.constant 7 : index
    %c0_32 = arith.constant 0 : index
    %21 = vector.load %arg5[%c2, %c7_31, %c0_32] : memref<18x32x8xbf16, #tpu.memory_space<vmem>>, vector<16x16x8xbf16>
    %22 = vector.shape_cast %21 : vector<16x16x8xbf16> to vector<256x8xbf16>
    %c2_33 = arith.constant 2 : index
    %c8_34 = arith.constant 8 : index
    %c0_35 = arith.constant 0 : index
    %23 = vector.load %arg5[%c2_33, %c8_34, %c0_35] : memref<18x32x8xbf16, #tpu.memory_space<vmem>>, vector<16x16x8xbf16>
    %24 = vector.shape_cast %23 : vector<16x16x8xbf16> to vector<256x8xbf16>
    %c2_36 = arith.constant 2 : index
    %c9_37 = arith.constant 9 : index
    %c0_38 = arith.constant 0 : index
    %25 = vector.load %arg5[%c2_36, %c9_37, %c0_38] : memref<18x32x8xbf16, #tpu.memory_space<vmem>>, vector<16x16x8xbf16>
    %26 = vector.shape_cast %25 : vector<16x16x8xbf16> to vector<256x8xbf16>
    %cst_39 = arith.constant 0.000000e+00 : bf16
    %27 = vector.broadcast %cst_39 : bf16 to vector<256x56xbf16>
    %28 = tpu.concatenate %10, %12, %14, %16, %18, %20, %22, %24, %26, %27 in 1 : vector<256x8xbf16>, vector<256x8xbf16>, vector<256x8xbf16>, vector<256x8xbf16>, vector<256x8xbf16>, vector<256x8xbf16>, vector<256x8xbf16>, vector<256x8xbf16>, vector<256x8xbf16>, vector<256x56xbf16> -> vector<256x128xbf16>
    %c0_40 = arith.constant 0 : index
    %c0_41 = arith.constant 0 : index
    %29 = vector.load %arg2[%c0_40, %c0_41] : memref<128x128xbf16, #tpu.memory_space<vmem>>, vector<128x128xbf16>
    %cst_42 = arith.constant dense<0.000000e+00> : vector<256x128xf32>
    %30 = tpu.matmul %28, %29, %cst_42 {dimension_numbers = #tpu.dot_dimension_numbers<[1], [0], [0], [1], [0, 0, 1, 1], [], []>} : vector<256x128xbf16>, vector<128x128xbf16>, vector<256x128xf32> -> vector<256x128xf32>
    %c0_43 = arith.constant 0 : index
    %c0_44 = arith.constant 0 : index
    %31 = vector.load %arg3[%c0_43, %c0_44] : memref<1x128xf32, #tpu.memory_space<vmem>>, vector<1x128xf32>
    %32 = vector.broadcast %31 : vector<1x128xf32> to vector<256x128xf32>
    %33 = arith.addf %30, %32 : vector<256x128xf32>
    %cst_45 = arith.constant 0.000000e+00 : f32
    %34 = vector.broadcast %cst_45 : f32 to vector<256x128xf32>
    %35 = arith.maximumf %33, %34 : vector<256x128xf32>
    %c0_46 = arith.constant 0 : index
    %c0_47 = arith.constant 0 : index
    %c0_48 = arith.constant 0 : index
    %36 = vector.load %arg4[%c0_46, %c0_47, %c0_48] : memref<1x256x128xf32, #tpu.memory_space<vmem>>, vector<1x256x128xf32>
    %37 = vector.shape_cast %36 : vector<1x256x128xf32> to vector<256x128xf32>
    %38 = vector.shape_cast %35 : vector<256x128xf32> to vector<1x256x128xf32>
    tpu.vector_store %arg4[%c0_46, %c0_47, %c0_48], %38 {strides = array<i32>} : memref<1x256x128xf32, #tpu.memory_space<vmem>>, vector<1x256x128xf32>,
    return
  }
  func.func @transform_0(%arg0: i32) -> (i32, i32, i32, i32) {
    %c0_i32 = arith.constant 0 : i32
    %c0_i32_0 = arith.constant 0 : i32
    %c0_i32_1 = arith.constant 0 : i32
    %c0_i32_2 = arith.constant 0 : i32
    return %arg0, %c0_i32, %c0_i32_0, %c0_i32_1 : i32, i32, i32, i32
  }
  func.func @transform_1(%arg0: i32) -> (i32, i32) {
    %c0_i32 = arith.constant 0 : i32
    %c0_i32_0 = arith.constant 0 : i32
    %c0_i32_1 = arith.constant 0 : i32
    return %c0_i32, %c0_i32_0 : i32, i32
  }
  func.func @transform_2(%arg0: i32) -> (i32, i32) {
    %c0_i32 = arith.constant 0 : i32
    %c0_i32_0 = arith.constant 0 : i32
    %c0_i32_1 = arith.constant 0 : i32
    return %c0_i32, %c0_i32_0 : i32, i32
  }
  func.func @transform_3(%arg0: i32) -> (i32, i32, i32) {
    %c0_i32 = arith.constant 0 : i32
    %c0_i32_0 = arith.constant 0 : i32
    %c0_i32_1 = arith.constant 0 : i32
    return %arg0, %c0_i32, %c0_i32_0 : i32, i32, i32
  }
}

</mosaic_0001>

<llo_original>
// kernel: conv3bn_forward.1
$region0: #{conv3bn_forward.1}
  #allocation0 [shape = 'u32[]', space=smem, size = 0x4, offset = 0x4, fixed_abs, tag = 'smem constant byte address 0x4 - core index']
  #allocation1 [shape = 'u32[144,128]{1,0:T(1,128)}', space=vmem, size = 0x12000, scoped, tag = 'internal scratch']
  #allocation2 [shape = 'bf16[18,32,8]{2,1,0:T(16,128)(2,1)}', space=vmem, size = 0x24000, scoped, tag = 'scratch operand']
  %s0 = inlined_call_operand.vmem [shape: bf16[2,16,16,8], index: 0, kind: input, shape index: {}]
  %s1 = inlined_call_operand.vmem [shape: bf16[128,128], index: 1, kind: input, shape index: {}]
  %s2 = inlined_call_operand.vmem [shape: f32[1,128], index: 2, kind: input, shape index: {}]
  %s3 = inlined_call_operand.vmem [shape: f32[2,256,128], index: 3, kind: output, shape index: {}]
  %s4 = sld [smem:[#allocation0]]
  $region45: #{conv3bn_forward.1} parent=0
    _
  %s6 = ssub.s32 1, %s4
  %s7 = scalar_select 0, %s6, %s4
  loop: start=0, step=1, limit=4
  $region2: #{conv3bn_forward.1} parent=0 // loop_pre_header
    _
  $region3: #{conv3bn_forward.1} parent=0 // loop_header
    %s9 = sphi 0, %s13
    %p10 = scmp.ge.s32.totalorder %s9, 4
    %s19 = sphi 0, %s21
    %s22 = sphi 0, %s19
    %s23 = sphi 0, %s22
    %s39 = sphi 0, %s23
    %s43 = sphi 0, %s43
    %s45 = sphi 0, %s43
    %s46 = sphi 0, %s45
    %s60 = sphi 0, %s46
    %s64 = sphi 0, %s64
    %s66 = sphi 0, %s64
    %s67 = sphi 0, %s66
    %s81 = sphi 0, %s67
    %s87 = sphi 0, %s89
    %s90 = sphi 0, %s87
    %s91 = sphi 0, %s90
    %s107 = sphi 0, %s91
  $region4: #{conv3bn_forward.1} parent=0 // loop_header_branch
    %12 = sbr.rel (%p10) target = $region8
  $region5: #{conv3bn_forward.1} parent=0 // loop_body
    %s14 = ssub.s32 %s9, 1
    %s15 = ssub.s32 %s9, 2
    %s16 = sadd.s32 %s9, 1
    %s17 = ssub.s32 %s9, %s16
    %p18 = scmp.eq.s32.totalorder %s17, 0
    %s20 = sadd.s32 %s19, 1
    %s21 = scalar_select %p18, %s19, %s20
    %p24 = pneg %p18
    %p25 = scmp.eq.s32.totalorder %s9, 1
    %p26 = por %p24, %p25
    %p27 = scmp.ne.s32.totalorder %s19, %s22
    %p28 = scmp.eq.s32.totalorder %s9, 0
    %p29 = por %p27, %p28
    %p30 = scmp.ne.s32.totalorder %s19, %s22
    %p31 = scmp.eq.s32.totalorder %s14, 1
    %p32 = por %p30, %p31
    %p33 = scmp.ne.s32.totalorder %s22, %s23
    %p34 = scmp.eq.s32.totalorder %s14, 0
    %p35 = por %p33, %p34
    %p36 = scmp.ne.s32.totalorder %s22, %s23
    %p37 = scmp.eq.s32.totalorder %s15, 1
    %p38 = por %p36, %p37
    %p40 = scmp.ne.s32.totalorder %s23, %s39
    %p41 = scmp.eq.s32.totalorder %s15, 0
    %p42 = por %p40, %p41
    %s44 = sadd.s32 %s43, 1
    %p47 = scmp.eq.s32.totalorder %s9, 1
    %p48 = scmp.ne.s32.totalorder %s43, %s45
    %p49 = scmp.eq.s32.totalorder %s9, 0
    %p50 = por %p48, %p49
    %p51 = scmp.ne.s32.totalorder %s43, %s45
    %p52 = scmp.eq.s32.totalorder %s14, 1
    %p53 = por %p51, %p52
    %p54 = scmp.ne.s32.totalorder %s45, %s46
    %p55 = scmp.eq.s32.totalorder %s14, 0
    %p56 = por %p54, %p55
    %p57 = scmp.ne.s32.totalorder %s45, %s46
    %p58 = scmp.eq.s32.totalorder %s15, 1
    %p59 = por %p57, %p58
    %p61 = scmp.ne.s32.totalorder %s46, %s60
    %p62 = scmp.eq.s32.totalorder %s15, 0
    %p63 = por %p61, %p62
    %s65 = sadd.s32 %s64, 1
    %p68 = scmp.eq.s32.totalorder %s9, 1
    %p69 = scmp.ne.s32.totalorder %s64, %s66
    %p70 = scmp.eq.s32.totalorder %s9, 0
    %p71 = por %p69, %p70
    %p72 = scmp.ne.s32.totalorder %s64, %s66
    %p73 = scmp.eq.s32.totalorder %s14, 1
    %p74 = por %p72, %p73
    %p75 = scmp.ne.s32.totalorder %s66, %s67
    %p76 = scmp.eq.s32.totalorder %s14, 0
    %p77 = por %p75, %p76
    %p78 = scmp.ne.s32.totalorder %s66, %s67
    %p79 = scmp.eq.s32.totalorder %s15, 1
    %p80 = por %p78, %p79
    %p82 = scmp.ne.s32.totalorder %s67, %s81
    %p83 = scmp.eq.s32.totalorder %s15, 0
    %p84 = por %p82, %p83
    %s85 = ssub.s32 %s9, %s16
    %p86 = scmp.eq.s32.totalorder %s85, 0
    %s88 = sadd.s32 %s87, 1
    %s89 = scalar_select %p86, %s87, %s88
    %p92 = pneg %p86
    %p93 = scmp.eq.s32.totalorder %s9, 1
    %p94 = por %p92, %p93
    %p95 = scmp.ne.s32.totalorder %s87, %s90
    %p96 = scmp.eq.s32.totalorder %s9, 0
    %p97 = por %p95, %p96
    %p98 = scmp.ne.s32.totalorder %s87, %s90
    %p99 = scmp.eq.s32.totalorder %s14, 1
    %p100 = por %p98, %p99
    %p101 = scmp.ne.s32.totalorder %s90, %s91
    %p102 = scmp.eq.s32.totalorder %s14, 0
    %p103 = por %p101, %p102
    %p104 = scmp.ne.s32.totalorder %s90, %s91
    %p105 = scmp.eq.s32.totalorder %s15, 1
    %p106 = por %p104, %p105
    %p108 = scmp.ne.s32.totalorder %s91, %s107
    %p109 = scmp.eq.s32.totalorder %s15, 0
    %p110 = por %p108, %p109
    %p111 = scmp.le.s32.totalorder 1, %s9
    %p112 = scmp.lt.s32.totalorder %s9, 3
    %p113 = pnand %p111, %p112
    %p114 = pneg %p113
    // Predicated region
    $region9: #{conv3bn_forward.1} parent=5 // pred_check
      _
    $region10: #{conv3bn_forward.1} parent=5 // pred_check_branch
      %116 = sbr.rel (%p113) target = $region12
    $region11: #{conv3bn_forward.1} parent=5 // pred_region
      %s117 = ssub.s32 %s9, 1
      // Predicated region
      $region13: #{conv3bn_forward.1} parent=11 // pred_check
        %p118 = pneg %p56
      $region14: #{conv3bn_forward.1} parent=11 // pred_check_branch
        %120 = sbr.rel (%p118) target = $region16
      $region15: #{conv3bn_forward.1} parent=11 // pred_region
        _
      $region16: #{conv3bn_forward.1} parent=11 // pred_fallthru
        _
      // Predicated region
      $region17: #{conv3bn_forward.1} parent=11 // pred_check
        %p121 = pneg %p77
      $region18: #{conv3bn_forward.1} parent=11 // pred_check_branch
        %123 = sbr.rel (%p121) target = $region20
      $region19: #{conv3bn_forward.1} parent=11 // pred_region
        _
      $region20: #{conv3bn_forward.1} parent=11 // pred_fallthru
        _
    $region12: #{conv3bn_forward.1} parent=5 // pred_fallthru
      _
    %p124 = scmp.lt.s32.totalorder %s9, 2
    // Predicated region
    $region21: #{conv3bn_forward.1} parent=5 // pred_check
      %p125 = pneg %p124
    $region22: #{conv3bn_forward.1} parent=5 // pred_check_branch
      %127 = sbr.rel (%p125) target = $region24
    $region23: #{conv3bn_forward.1} parent=5 // pred_region
      // Predicated region
      $region25: #{conv3bn_forward.1} parent=23 // pred_check
        %p128 = pneg %p29
      $region26: #{conv3bn_forward.1} parent=23 // pred_check_branch
        %130 = sbr.rel (%p128) target = $region28
      $region27: #{conv3bn_forward.1} parent=23 // pred_region
        %p131 = scmp.lt.s32.totalorder %s9, 1
        %s132 = scalar_select %p131, %s9, 1
        %s133 = smul.addr %s132, 32
        %s134 = smul.addr %s133, 4
        %s135 = scalar_lea.vmem %s0, %s134
      $region28: #{conv3bn_forward.1} parent=23 // pred_fallthru
        _
    $region24: #{conv3bn_forward.1} parent=5 // pred_fallthru
      _
    %p136 = scmp.le.s32.totalorder 1, %s9
    %p137 = scmp.lt.s32.totalorder %s9, 3
    %p138 = pnand %p136, %p137
    %p139 = pneg %p138
    // Predicated region
    $region29: #{conv3bn_forward.1} parent=5 // pred_check
      _
    $region30: #{conv3bn_forward.1} parent=5 // pred_check_branch
      %141 = sbr.rel (%p138) target = $region32
    $region31: #{conv3bn_forward.1} parent=5 // pred_region
      %s142 = ssub.s32 %s9, 1
      %p143 = scmp.lt.s32.totalorder %s14, 1
      %s144 = scalar_select %p143, %s14, 1
      %s145 = smul.addr %s144, 32
      %s146 = smul.addr %s145, 4
      %s147 = scalar_lea.vmem %s0, %s146
      %p148 = pneg %p35
      %p149 = pneg %p32
      %p150 = pneg %p56
      %p151 = pneg %p53
      %p152 = pneg %p77
      %p153 = pneg %p74
      %p154 = pneg %p103
      %p155 = pneg %p100
      %p156 = scmp.lt.s32.totalorder %s14, 1
      %s157 = scalar_select %p156, %s14, 1
      %s158 = smul.addr %s157, 32
      %s159 = smul.addr %s158, 8
      %s160 = scalar_lea.vmem %s3, %s159
      %p161 = scmp.lt.s32.totalorder %s14, 1
      %s162 = scalar_select %p161, %s14, 1
      %s163 = smul.addr %s162, 32
      %s164 = smul.addr %s163, 4
      %s165 = scalar_lea.vmem %s0, %s164
      %p166 = scmp.lt.s32.totalorder %s14, 1
      %s167 = scalar_select %p166, %s14, 1
      %s168 = smul.addr %s167, 32
      %s169 = smul.addr %s168, 8
      %s170 = scalar_lea.vmem %s3, %s169
      %vm172 = vcmask 64515
      %vm173 = vsmask.f32 7950
      %vm174 = vmand %vm172, %vm173
      %v175 = vld [vmem:[#allocation2] sm:$0xf8]
      %v176 = vsel %vm174, 0, %v175
      %177 = vst [vmem:[#allocation2] sm:$0xf8] %v176
      %vm178 = vcmask 61440
      %vm179 = vsmask.f32 4352
      %vm180 = vmand %vm178, %vm179
      %v181 = vld [vmem:[#allocation2 + $0x8] sm:$0x1f]
      %v182 = vsel %vm180, 0, %v181
      %183 = vst [vmem:[#allocation2 + $0x8] sm:$0x1f] %v182
      %s184 = scalar_lea.vmem [#allocation2], 272
      %v185 = vld [vmem:[%s184] sm:$0xf8]
      %v186 = vsel %vm174, 0, %v185
      %187 = vst [vmem:[%s184] sm:$0xf8] %v186
      %v188 = vld [vmem:[%s184 + $0x8] sm:$0x1f]
      %v189 = vsel %vm180, 0, %v188
      %190 = vst [vmem:[%s184 + $0x8] sm:$0x1f] %v189
      %s191 = scalar_lea.vmem [#allocation2], 16
      %vm192 = vcmask 60419
      %vm193 = vmand %vm192, %vm173
      %v194 = vld [vmem:[%s191] sm:$0x8]
      %v195 = vsel %vm193, 0, %v194
      %196 = vst [vmem:[%s191] sm:$0x8] %v195
      %v197 = vld [vmem:[%s191 + $0x10] sm:$0x8]
      %v198 = vsel %vm193, 0, %v197
      %199 = vst [vmem:[%s191 + $0x10] sm:$0x8] %v198
      %v200 = vld [vmem:[%s191 + $0x20] sm:$0x8]
      %v201 = vsel %vm193, 0, %v200
      %202 = vst [vmem:[%s191 + $0x20] sm:$0x8] %v201
      %v203 = vld [vmem:[%s191 + $0x30] sm:$0x8]
      %v204 = vsel %vm193, 0, %v203
      %205 = vst [vmem:[%s191 + $0x30] sm:$0x8] %v204
      %v206 = vld [vmem:[%s191 + $0x40] sm:$0x8]
      %v207 = vsel %vm193, 0, %v206
      %208 = vst [vmem:[%s191 + $0x40] sm:$0x8] %v207
      %v209 = vld [vmem:[%s191 + $0x50] sm:$0x8]
      %v210 = vsel %vm193, 0, %v209
      %211 = vst [vmem:[%s191 + $0x50] sm:$0x8] %v210
      %v212 = vld [vmem:[%s191 + $0x60] sm:$0x8]
      %v213 = vsel %vm193, 0, %v212
      %214 = vst [vmem:[%s191 + $0x60] sm:$0x8] %v213
      %v215 = vld [vmem:[%s191 + $0x70] sm:$0x8]
      %v216 = vsel %vm193, 0, %v215
      %217 = vst [vmem:[%s191 + $0x70] sm:$0x8] %v216
      %v218 = vld [vmem:[%s191 + $0x80] sm:$0x8]
      %v219 = vsel %vm193, 0, %v218
      %220 = vst [vmem:[%s191 + $0x80] sm:$0x8] %v219
      %v221 = vld [vmem:[%s191 + $0x90] sm:$0x8]
      %v222 = vsel %vm193, 0, %v221
      %223 = vst [vmem:[%s191 + $0x90] sm:$0x8] %v222
      %v224 = vld [vmem:[%s191 + $0xa0] sm:$0x8]
      %v225 = vsel %vm193, 0, %v224
      %226 = vst [vmem:[%s191 + $0xa0] sm:$0x8] %v225
      %v227 = vld [vmem:[%s191 + $0xb0] sm:$0x8]
      %v228 = vsel %vm193, 0, %v227
      %229 = vst [vmem:[%s191 + $0xb0] sm:$0x8] %v228
      %v230 = vld [vmem:[%s191 + $0xc0] sm:$0x8]
      %v231 = vsel %vm193, 0, %v230
      %232 = vst [vmem:[%s191 + $0xc0] sm:$0x8] %v231
      %v233 = vld [vmem:[%s191 + $0xd0] sm:$0x8]
      %v234 = vsel %vm193, 0, %v233
      %235 = vst [vmem:[%s191 + $0xd0] sm:$0x8] %v234
      %v236 = vld [vmem:[%s191 + $0xe0] sm:$0x8]
      %v237 = vsel %vm193, 0, %v236
      %238 = vst [vmem:[%s191 + $0xe0] sm:$0x8] %v237
      %v239 = vld [vmem:[%s191 + $0xf0] sm:$0x8]
      %v240 = vsel %vm193, 0, %v239
      %241 = vst [vmem:[%s191 + $0xf0] sm:$0x8] %v240
      %vm242 = vcmask 61444
      %vm243 = vmand %vm242, %vm179
      %v244 = vld [vmem:[%s191 + $0x8] sm:$0x10]
      %v245 = vsel %vm243, 0, %v244
      %246 = vst [vmem:[%s191 + $0x8] sm:$0x10] %v245
      %v247 = vld [vmem:[%s191 + $0x18] sm:$0x10]
      %v248 = vsel %vm243, 0, %v247
      %249 = vst [vmem:[%s191 + $0x18] sm:$0x10] %v248
      %v250 = vld [vmem:[%s191 + $0x28] sm:$0x10]
      %v251 = vsel %vm243, 0, %v250
      %252 = vst [vmem:[%s191 + $0x28] sm:$0x10] %v251
      %v253 = vld [vmem:[%s191 + $0x38] sm:$0x10]
      %v254 = vsel %vm243, 0, %v253
      %255 = vst [vmem:[%s191 + $0x38] sm:$0x10] %v254
      %v256 = vld [vmem:[%s191 + $0x48] sm:$0x10]
      %v257 = vsel %vm243, 0, %v256
      %258 = vst [vmem:[%s191 + $0x48] sm:$0x10] %v257
      %v259 = vld [vmem:[%s191 + $0x58] sm:$0x10]
      %v260 = vsel %vm243, 0, %v259
      %261 = vst [vmem:[%s191 + $0x58] sm:$0x10] %v260
      %v262 = vld [vmem:[%s191 + $0x68] sm:$0x10]
      %v263 = vsel %vm243, 0, %v262
      %264 = vst [vmem:[%s191 + $0x68] sm:$0x10] %v263
      %v265 = vld [vmem:[%s191 + $0x78] sm:$0x10]
      %v266 = vsel %vm243, 0, %v265
      %267 = vst [vmem:[%s191 + $0x78] sm:$0x10] %v266
      %v268 = vld [vmem:[%s191 + $0x88] sm:$0x10]
      %v269 = vsel %vm243, 0, %v268
      %270 = vst [vmem:[%s191 + $0x88] sm:$0x10] %v269
      %v271 = vld [vmem:[%s191 + $0x98] sm:$0x10]
      %v272 = vsel %vm243, 0, %v271
      %273 = vst [vmem:[%s191 + $0x98] sm:$0x10] %v272
      %v274 = vld [vmem:[%s191 + $0xa8] sm:$0x10]
      %v275 = vsel %vm243, 0, %v274
      %276 = vst [vmem:[%s191 + $0xa8] sm:$0x10] %v275
      %v277 = vld [vmem:[%s191 + $0xb8] sm:$0x10]
      %v278 = vsel %vm243, 0, %v277
      %279 = vst [vmem:[%s191 + $0xb8] sm:$0x10] %v278
      %v280 = vld [vmem:[%s191 + $0xc8] sm:$0x10]
      %v281 = vsel %vm243, 0, %v280
      %282 = vst [vmem:[%s191 + $0xc8] sm:$0x10] %v281
      %v283 = vld [vmem:[%s191 + $0xd8] sm:$0x10]
      %v284 = vsel %vm243, 0, %v283
      %285 = vst [vmem:[%s191 + $0xd8] sm:$0x10] %v284
      %v286 = vld [vmem:[%s191 + $0xe8] sm:$0x10]
      %v287 = vsel %vm243, 0, %v286
      %288 = vst [vmem:[%s191 + $0xe8] sm:$0x10] %v287
      %v289 = vld [vmem:[%s191 + $0xf8] sm:$0x10]
      %v290 = vsel %vm243, 0, %v289
      %291 = vst [vmem:[%s191 + $0xf8] sm:$0x10] %v290
      %v292 = vld [vmem:[%s165] sm:$0xf]
      %v293 = vld [vmem:[%s165 + $0x4] sm:$0xf]
      %v294 = vld [vmem:[%s165 + $0x8] sm:$0xf]
      %v295 = vld [vmem:[%s165 + $0xc] sm:$0xf]
      %v296 = vld [vmem:[%s165 + $0x10] sm:$0xf]
      %v297 = vld [vmem:[%s165 + $0x14] sm:$0xf]
      %v298 = vld [vmem:[%s165 + $0x18] sm:$0xf]
      %v299 = vld [vmem:[%s165 + $0x1c] sm:$0xf]
      %v300 = vld [vmem:[%s165 + $0x20] sm:$0xf]
      %v301 = vld [vmem:[%s165 + $0x24] sm:$0xf]
      %v302 = vld [vmem:[%s165 + $0x28] sm:$0xf]
      %v303 = vld [vmem:[%s165 + $0x2c] sm:$0xf]
      %v304 = vld [vmem:[%s165 + $0x30] sm:$0xf]
      %v305 = vld [vmem:[%s165 + $0x34] sm:$0xf]
      %v306 = vld [vmem:[%s165 + $0x38] sm:$0xf]
      %v307 = vld [vmem:[%s165 + $0x3c] sm:$0xf]
      %v308 = vld [vmem:[%s165 + $0x40] sm:$0xf]
      %v309 = vld [vmem:[%s165 + $0x44] sm:$0xf]
      %v310 = vld [vmem:[%s165 + $0x48] sm:$0xf]
      %v311 = vld [vmem:[%s165 + $0x4c] sm:$0xf]
      %v312 = vld [vmem:[%s165 + $0x50] sm:$0xf]
      %v313 = vld [vmem:[%s165 + $0x54] sm:$0xf]
      %v314 = vld [vmem:[%s165 + $0x58] sm:$0xf]
      %v315 = vld [vmem:[%s165 + $0x5c] sm:$0xf]
      %v316 = vld [vmem:[%s165 + $0x60] sm:$0xf]
      %v317 = vld [vmem:[%s165 + $0x64] sm:$0xf]
      %v318 = vld [vmem:[%s165 + $0x68] sm:$0xf]
      %v319 = vld [vmem:[%s165 + $0x6c] sm:$0xf]
      %v320 = vld [vmem:[%s165 + $0x70] sm:$0xf]
      %v321 = vld [vmem:[%s165 + $0x74] sm:$0xf]
      %v322 = vld [vmem:[%s165 + $0x78] sm:$0xf]
      %v323 = vld [vmem:[%s165 + $0x7c] sm:$0xf]
      %v356 = vunpack.c.l.b16 %v292
      %v357 = vunpack.c.l.b16 %v293
      %v358 = vunpack.c.l.b16 %v294
      %v359 = vunpack.c.l.b16 %v295
      %v360 = vunpack.c.l.b16 %v296
      %v361 = vunpack.c.l.b16 %v297
      %v362 = vunpack.c.l.b16 %v298
      %v363 = vunpack.c.l.b16 %v299
      %v364 = vunpack.c.l.b16 %v300
      %v365 = vunpack.c.l.b16 %v301
      %v366 = vunpack.c.l.b16 %v302
      %v367 = vunpack.c.l.b16 %v303
      %v368 = vunpack.c.l.b16 %v304
      %v369 = vunpack.c.l.b16 %v305
      %v370 = vunpack.c.l.b16 %v306
      %v371 = vunpack.c.l.b16 %v307
      %v372 = vunpack.c.l.b16 %v308
      %v373 = vunpack.c.l.b16 %v309
      %v374 = vunpack.c.l.b16 %v310
      %v375 = vunpack.c.l.b16 %v311
      %v376 = vunpack.c.l.b16 %v312
      %v377 = vunpack.c.l.b16 %v313
      %v378 = vunpack.c.l.b16 %v314
      %v379 = vunpack.c.l.b16 %v315
      %v380 = vunpack.c.l.b16 %v316
      %v381 = vunpack.c.l.b16 %v317
      %v382 = vunpack.c.l.b16 %v318
      %v383 = vunpack.c.l.b16 %v319
      %v384 = vunpack.c.l.b16 %v320
      %v385 = vunpack.c.l.b16 %v321
      %v386 = vunpack.c.l.b16 %v322
      %v387 = vunpack.c.l.b16 %v323
      %v388 = vpack.c.b16 %v356, %v356
      %v389 = vpack.c.b16 %v357, %v357
      %v390 = vpack.c.b16 %v358, %v358
      %v391 = vpack.c.b16 %v359, %v359
      %v392 = vpack.c.b16 %v360, %v360
      %v393 = vpack.c.b16 %v361, %v361
      %v394 = vpack.c.b16 %v362, %v362
      %v395 = vpack.c.b16 %v363, %v363
      %v396 = vpack.c.b16 %v364, %v364
      %v397 = vpack.c.b16 %v365, %v365
      %v398 = vpack.c.b16 %v366, %v366
      %v399 = vpack.c.b16 %v367, %v367
      %v400 = vpack.c.b16 %v368, %v368
      %v401 = vpack.c.b16 %v369, %v369
      %v402 = vpack.c.b16 %v370, %v370
      %v403 = vpack.c.b16 %v371, %v371
      %v404 = vpack.c.b16 %v372, %v372
      %v405 = vpack.c.b16 %v373, %v373
      %v406 = vpack.c.b16 %v374, %v374
      %v407 = vpack.c.b16 %v375, %v375
      %v408 = vpack.c.b16 %v376, %v376
      %v409 = vpack.c.b16 %v377, %v377
      %v410 = vpack.c.b16 %v378, %v378
      %v411 = vpack.c.b16 %v379, %v379
      %v412 = vpack.c.b16 %v380, %v380
      %v413 = vpack.c.b16 %v381, %v381
      %v414 = vpack.c.b16 %v382, %v382
      %v415 = vpack.c.b16 %v383, %v383
      %v416 = vpack.c.b16 %v384, %v384
      %v417 = vpack.c.b16 %v385, %v385
      %v418 = vpack.c.b16 %v386, %v386
      %v419 = vpack.c.b16 %v387, %v387
      %vm452 = vcmask 64516
      %453 = vst.msk [vmem:[%s191] sm:$0xf0] %vm452, %v388
      %vm454 = vcmask 60416
      %455 = vst.msk [vmem:[%s191 + $0x8] sm:$0xf] %vm454, %v389
      %456 = vst.msk [vmem:[%s191 + $0x10] sm:$0xf0] %vm452, %v390
      %457 = vst.msk [vmem:[%s191 + $0x18] sm:$0xf] %vm454, %v391
      %458 = vst.msk [vmem:[%s191 + $0x20] sm:$0xf0] %vm452, %v392
      %459 = vst.msk [vmem:[%s191 + $0x28] sm:$0xf] %vm454, %v393
      %460 = vst.msk [vmem:[%s191 + $0x30] sm:$0xf0] %vm452, %v394
      %461 = vst.msk [vmem:[%s191 + $0x38] sm:$0xf] %vm454, %v395
      %462 = vst.msk [vmem:[%s191 + $0x40] sm:$0xf0] %vm452, %v396
      %463 = vst.msk [vmem:[%s191 + $0x48] sm:$0xf] %vm454, %v397
      %464 = vst.msk [vmem:[%s191 + $0x50] sm:$0xf0] %vm452, %v398
      %465 = vst.msk [vmem:[%s191 + $0x58] sm:$0xf] %vm454, %v399
      %466 = vst.msk [vmem:[%s191 + $0x60] sm:$0xf0] %vm452, %v400
      %467 = vst.msk [vmem:[%s191 + $0x68] sm:$0xf] %vm454, %v401
      %468 = vst.msk [vmem:[%s191 + $0x70] sm:$0xf0] %vm452, %v402
      %469 = vst.msk [vmem:[%s191 + $0x78] sm:$0xf] %vm454, %v403
      %470 = vst.msk [vmem:[%s191 + $0x80] sm:$0xf0] %vm452, %v404
      %471 = vst.msk [vmem:[%s191 + $0x88] sm:$0xf] %vm454, %v405
      %472 = vst.msk [vmem:[%s191 + $0x90] sm:$0xf0] %vm452, %v406
      %473 = vst.msk [vmem:[%s191 + $0x98] sm:$0xf] %vm454, %v407
      %474 = vst.msk [vmem:[%s191 + $0xa0] sm:$0xf0] %vm452, %v408
      %475 = vst.msk [vmem:[%s191 + $0xa8] sm:$0xf] %vm454, %v409
      %476 = vst.msk [vmem:[%s191 + $0xb0] sm:$0xf0] %vm452, %v410
      %477 = vst.msk [vmem:[%s191 + $0xb8] sm:$0xf] %vm454, %v411
      %478 = vst.msk [vmem:[%s191 + $0xc0] sm:$0xf0] %vm452, %v412
      %479 = vst.msk [vmem:[%s191 + $0xc8] sm:$0xf] %vm454, %v413
      %480 = vst.msk [vmem:[%s191 + $0xd0] sm:$0xf0] %vm452, %v414
      %481 = vst.msk [vmem:[%s191 + $0xd8] sm:$0xf] %vm454, %v415
      %482 = vst.msk [vmem:[%s191 + $0xe0] sm:$0xf0] %vm452, %v416
      %483 = vst.msk [vmem:[%s191 + $0xe8] sm:$0xf] %vm454, %v417
      %484 = vst.msk [vmem:[%s191 + $0xf0] sm:$0xf0] %vm452, %v418
      %485 = vst.msk [vmem:[%s191 + $0xf8] sm:$0xf] %vm454, %v419
      %v486 = vld [vmem:[#allocation2] sm:$0xf8]
      %v487 = vld [vmem:[#allocation2 + $0x8] sm:$0xf]
      %v488 = vld [vmem:[#allocation2 + $0x10] sm:$0xf8]
      %v489 = vld [vmem:[#allocation2 + $0x18] sm:$0xf]
      %v490 = vld [vmem:[#allocation2 + $0x20] sm:$0xf8]
      %v491 = vld [vmem:[#allocation2 + $0x28] sm:$0xf]
      %v492 = vld [vmem:[#allocation2 + $0x30] sm:$0xf8]
      %v493 = vld [vmem:[#allocation2 + $0x38] sm:$0xf]
      %v494 = vld [vmem:[#allocation2 + $0x40] sm:$0xf8]
      %v495 = vld [vmem:[#allocation2 + $0x48] sm:$0xf]
      %v496 = vld [vmem:[#allocation2 + $0x50] sm:$0xf8]
      %v497 = vld [vmem:[#allocation2 + $0x58] sm:$0xf]
      %v498 = vld [vmem:[#allocation2 + $0x60] sm:$0xf8]
      %v499 = vld [vmem:[#allocation2 + $0x68] sm:$0xf]
      %v500 = vld [vmem:[#allocation2 + $0x70] sm:$0xf8]
      %v501 = vld [vmem:[#allocation2 + $0x78] sm:$0xf]
      %v502 = vld [vmem:[#allocation2 + $0x80] sm:$0xf8]
      %v503 = vld [vmem:[#allocation2 + $0x88] sm:$0xf]
      %v504 = vld [vmem:[#allocation2 + $0x90] sm:$0xf8]
      %v505 = vld [vmem:[#allocation2 + $0x98] sm:$0xf]
      %v506 = vld [vmem:[#allocation2 + $0xa0] sm:$0xf8]
      %v507 = vld [vmem:[#allocation2 + $0xa8] sm:$0xf]
      %v508 = vld [vmem:[#allocation2 + $0xb0] sm:$0xf8]
      %v509 = vld [vmem:[#allocation2 + $0xb8] sm:$0xf]
      %v510 = vld [vmem:[#allocation2 + $0xc0] sm:$0xf8]
      %v511 = vld [vmem:[#allocation2 + $0xc8] sm:$0xf]
      %v512 = vld [vmem:[#allocation2 + $0xd0] sm:$0xf8]
      %v513 = vld [vmem:[#allocation2 + $0xd8] sm:$0xf]
      %v514 = vld [vmem:[#allocation2 + $0xe0] sm:$0xf8]
      %v515 = vld [vmem:[#allocation2 + $0xe8] sm:$0xf]
      %v516 = vld [vmem:[#allocation2 + $0xf0] sm:$0xf8]
      %v517 = vld [vmem:[#allocation2 + $0xf8] sm:$0xf]
      %v519 = vshrl.u32 %v486, 16
      %v521 = vrot.slane %v519, 3
      %v522 = vshll.u32 %v486, 16
      %v524 = vrot.slane %v522, 4
      %v525 = vor.u32 %v521, %v524
      %v527 = vshrl.u32 %v487, 16
      %v529 = vrot.slane %v527, 3
      %v530 = vshll.u32 %v487, 16
      %v532 = vrot.slane %v530, 4
      %v533 = vor.u32 %v529, %v532
      %v534 = vsel %vm179, %v525, %v533
      %v536 = vshrl.u32 %v488, 16
      %v538 = vrot.slane %v536, 3
      %v539 = vshll.u32 %v488, 16
      %v541 = vrot.slane %v539, 4
      %v542 = vor.u32 %v538, %v541
      %v544 = vshrl.u32 %v489, 16
      %v546 = vrot.slane %v544, 3
      %v547 = vshll.u32 %v489, 16
      %v549 = vrot.slane %v547, 4
      %v550 = vor.u32 %v546, %v549
      %v551 = vsel %vm179, %v542, %v550
      %v553 = vshrl.u32 %v490, 16
      %v555 = vrot.slane %v553, 3
      %v556 = vshll.u32 %v490, 16
      %v558 = vrot.slane %v556, 4
      %v559 = vor.u32 %v555, %v558
      %v561 = vshrl.u32 %v491, 16
      %v563 = vrot.slane %v561, 3
      %v564 = vshll.u32 %v491, 16
      %v566 = vrot.slane %v564, 4
      %v567 = vor.u32 %v563, %v566
      %v568 = vsel %vm179, %v559, %v567
      %v570 = vshrl.u32 %v492, 16
      %v572 = vrot.slane %v570, 3
      %v573 = vshll.u32 %v492, 16
      %v575 = vrot.slane %v573, 4
      %v576 = vor.u32 %v572, %v575
      %v578 = vshrl.u32 %v493, 16
      %v580 = vrot.slane %v578, 3
      %v581 = vshll.u32 %v493, 16
      %v583 = vrot.slane %v581, 4
      %v584 = vor.u32 %v580, %v583
      %v585 = vsel %vm179, %v576, %v584
      %v587 = vshrl.u32 %v494, 16
      %v589 = vrot.slane %v587, 3
      %v590 = vshll.u32 %v494, 16
      %v592 = vrot.slane %v590, 4
      %v593 = vor.u32 %v589, %v592
      %v595 = vshrl.u32 %v495, 16
      %v597 = vrot.slane %v595, 3
      %v598 = vshll.u32 %v495, 16
      %v600 = vrot.slane %v598, 4
      %v601 = vor.u32 %v597, %v600
      %v602 = vsel %vm179, %v593, %v601
      %v604 = vshrl.u32 %v496, 16
      %v606 = vrot.slane %v604, 3
      %v607 = vshll.u32 %v496, 16
      %v609 = vrot.slane %v607, 4
      %v610 = vor.u32 %v606, %v609
      %v612 = vshrl.u32 %v497, 16
      %v614 = vrot.slane %v612, 3
      %v615 = vshll.u32 %v497, 16
      %v617 = vrot.slane %v615, 4
      %v618 = vor.u32 %v614, %v617
      %v619 = vsel %vm179, %v610, %v618
      %v621 = vshrl.u32 %v498, 16
      %v623 = vrot.slane %v621, 3
      %v624 = vshll.u32 %v498, 16
      %v626 = vrot.slane %v624, 4
      %v627 = vor.u32 %v623, %v626
      %v629 = vshrl.u32 %v499, 16
      %v631 = vrot.slane %v629, 3
      %v632 = vshll.u32 %v499, 16
      %v634 = vrot.slane %v632, 4
      %v635 = vor.u32 %v631, %v634
      %v636 = vsel %vm179, %v627, %v635
      %v638 = vshrl.u32 %v500, 16
      %v640 = vrot.slane %v638, 3
      %v641 = vshll.u32 %v500, 16
      %v643 = vrot.slane %v641, 4
      %v644 = vor.u32 %v640, %v643
      %v646 = vshrl.u32 %v501, 16
      %v648 = vrot.slane %v646, 3
      %v649 = vshll.u32 %v501, 16
      %v651 = vrot.slane %v649, 4
      %v652 = vor.u32 %v648, %v651
      %v653 = vsel %vm179, %v644, %v652
      %v655 = vshrl.u32 %v502, 16
      %v657 = vrot.slane %v655, 3
      %v658 = vshll.u32 %v502, 16
      %v660 = vrot.slane %v658, 4
      %v661 = vor.u32 %v657, %v660
      %v663 = vshrl.u32 %v503, 16
      %v665 = vrot.slane %v663, 3
      %v666 = vshll.u32 %v503, 16
      %v668 = vrot.slane %v666, 4
      %v669 = vor.u32 %v665, %v668
      %v670 = vsel %vm179, %v661, %v669
      %v672 = vshrl.u32 %v504, 16
      %v674 = vrot.slane %v672, 3
      %v675 = vshll.u32 %v504, 16
      %v677 = vrot.slane %v675, 4
      %v678 = vor.u32 %v674, %v677
      %v680 = vshrl.u32 %v505, 16
      %v682 = vrot.slane %v680, 3
      %v683 = vshll.u32 %v505, 16
      %v685 = vrot.slane %v683, 4
      %v686 = vor.u32 %v682, %v685
      %v687 = vsel %vm179, %v678, %v686
      %v689 = vshrl.u32 %v506, 16
      %v691 = vrot.slane %v689, 3
      %v692 = vshll.u32 %v506, 16
      %v694 = vrot.slane %v692, 4
      %v695 = vor.u32 %v691, %v694
      %v697 = vshrl.u32 %v507, 16
      %v699 = vrot.slane %v697, 3
      %v700 = vshll.u32 %v507, 16
      %v702 = vrot.slane %v700, 4
      %v703 = vor.u32 %v699, %v702
      %v704 = vsel %vm179, %v695, %v703
      %v706 = vshrl.u32 %v508, 16
      %v708 = vrot.slane %v706, 3
      %v709 = vshll.u32 %v508, 16
      %v711 = vrot.slane %v709, 4
      %v712 = vor.u32 %v708, %v711
      %v714 = vshrl.u32 %v509, 16
      %v716 = vrot.slane %v714, 3
      %v717 = vshll.u32 %v509, 16
      %v719 = vrot.slane %v717, 4
      %v720 = vor.u32 %v716, %v719
      %v721 = vsel %vm179, %v712, %v720
      %v723 = vshrl.u32 %v510, 16
      %v725 = vrot.slane %v723, 3
      %v726 = vshll.u32 %v510, 16
      %v728 = vrot.slane %v726, 4
      %v729 = vor.u32 %v725, %v728
      %v731 = vshrl.u32 %v511, 16
      %v733 = vrot.slane %v731, 3
      %v734 = vshll.u32 %v511, 16
      %v736 = vrot.slane %v734, 4
      %v737 = vor.u32 %v733, %v736
      %v738 = vsel %vm179, %v729, %v737
      %v740 = vshrl.u32 %v512, 16
      %v742 = vrot.slane %v740, 3
      %v743 = vshll.u32 %v512, 16
      %v745 = vrot.slane %v743, 4
      %v746 = vor.u32 %v742, %v745
      %v748 = vshrl.u32 %v513, 16
      %v750 = vrot.slane %v748, 3
      %v751 = vshll.u32 %v513, 16
      %v753 = vrot.slane %v751, 4
      %v754 = vor.u32 %v750, %v753
      %v755 = vsel %vm179, %v746, %v754
      %v757 = vshrl.u32 %v514, 16
      %v759 = vrot.slane %v757, 3
      %v760 = vshll.u32 %v514, 16
      %v762 = vrot.slane %v760, 4
      %v763 = vor.u32 %v759, %v762
      %v765 = vshrl.u32 %v515, 16
      %v767 = vrot.slane %v765, 3
      %v768 = vshll.u32 %v515, 16
      %v770 = vrot.slane %v768, 4
      %v771 = vor.u32 %v767, %v770
      %v772 = vsel %vm179, %v763, %v771
      %v774 = vshrl.u32 %v516, 16
      %v776 = vrot.slane %v774, 3
      %v777 = vshll.u32 %v516, 16
      %v779 = vrot.slane %v777, 4
      %v780 = vor.u32 %v776, %v779
      %v782 = vshrl.u32 %v517, 16
      %v784 = vrot.slane %v782, 3
      %v785 = vshll.u32 %v517, 16
      %v787 = vrot.slane %v785, 4
      %v788 = vor.u32 %v784, %v787
      %v789 = vsel %vm179, %v780, %v788
      %v790 = vld [vmem:[#allocation2] sm:$0xf0]
      %v791 = vld [vmem:[#allocation2 + $0x10] sm:$0xf0]
      %v792 = vld [vmem:[#allocation2 + $0x20] sm:$0xf0]
      %v793 = vld [vmem:[#allocation2 + $0x30] sm:$0xf0]
      %v794 = vld [vmem:[#allocation2 + $0x40] sm:$0xf0]
      %v795 = vld [vmem:[#allocation2 + $0x50] sm:$0xf0]
      %v796 = vld [vmem:[#allocation2 + $0x60] sm:$0xf0]
      %v797 = vld [vmem:[#allocation2 + $0x70] sm:$0xf0]
      %v798 = vld [vmem:[#allocation2 + $0x80] sm:$0xf0]
      %v799 = vld [vmem:[#allocation2 + $0x90] sm:$0xf0]
      %v800 = vld [vmem:[#allocation2 + $0xa0] sm:$0xf0]
      %v801 = vld [vmem:[#allocation2 + $0xb0] sm:$0xf0]
      %v802 = vld [vmem:[#allocation2 + $0xc0] sm:$0xf0]
      %v803 = vld [vmem:[#allocation2 + $0xd0] sm:$0xf0]
      %v804 = vld [vmem:[#allocation2 + $0xe0] sm:$0xf0]
      %v805 = vld [vmem:[#allocation2 + $0xf0] sm:$0xf0]
      %vm838 = vcmask 1043456
      %v839 = vrot.slane %v790, 4
      %v840 = vrot.slane %v487, 4
      %v841 = vsel %vm838, %v839, %v840
      %v842 = vrot.slane %v791, 4
      %v843 = vrot.slane %v489, 4
      %v844 = vsel %vm838, %v842, %v843
      %v845 = vrot.slane %v792, 4
      %v846 = vrot.slane %v491, 4
      %v847 = vsel %vm838, %v845, %v846
      %v848 = vrot.slane %v793, 4
      %v849 = vrot.slane %v493, 4
      %v850 = vsel %vm838, %v848, %v849
      %v851 = vrot.slane %v794, 4
      %v852 = vrot.slane %v495, 4
      %v853 = vsel %vm838, %v851, %v852
      %v854 = vrot.slane %v795, 4
      %v855 = vrot.slane %v497, 4
      %v856 = vsel %vm838, %v854, %v855
      %v857 = vrot.slane %v796, 4
      %v858 = vrot.slane %v499, 4
      %v859 = vsel %vm838, %v857, %v858
      %v860 = vrot.slane %v797, 4
      %v861 = vrot.slane %v501, 4
      %v862 = vsel %vm838, %v860, %v861
      %v863 = vrot.slane %v798, 4
      %v864 = vrot.slane %v503, 4
      %v865 = vsel %vm838, %v863, %v864
      %v866 = vrot.slane %v799, 4
      %v867 = vrot.slane %v505, 4
      %v868 = vsel %vm838, %v866, %v867
      %v869 = vrot.slane %v800, 4
      %v870 = vrot.slane %v507, 4
      %v871 = vsel %vm838, %v869, %v870
      %v872 = vrot.slane %v801, 4
      %v873 = vrot.slane %v509, 4
      %v874 = vsel %vm838, %v872, %v873
      %v875 = vrot.slane %v802, 4
      %v876 = vrot.slane %v511, 4
      %v877 = vsel %vm838, %v875, %v876
      %v878 = vrot.slane %v803, 4
      %v879 = vrot.slane %v513, 4
      %v880 = vsel %vm838, %v878, %v879
      %v881 = vrot.slane %v804, 4
      %v882 = vrot.slane %v515, 4
      %v883 = vsel %vm838, %v881, %v882
      %v884 = vrot.slane %v805, 4
      %v885 = vrot.slane %v517, 4
      %v886 = vsel %vm838, %v884, %v885
      %v887 = vld [vmem:[#allocation2 + $0x8] sm:$0x1f]
      %v888 = vld [vmem:[#allocation2 + $0x18] sm:$0x1f]
      %v889 = vld [vmem:[#allocation2 + $0x28] sm:$0x1f]
      %v890 = vld [vmem:[#allocation2 + $0x38] sm:$0x1f]
      %v891 = vld [vmem:[#allocation2 + $0x48] sm:$0x1f]
      %v892 = vld [vmem:[#allocation2 + $0x58] sm:$0x1f]
      %v893 = vld [vmem:[#allocation2 + $0x68] sm:$0x1f]
      %v894 = vld [vmem:[#allocation2 + $0x78] sm:$0x1f]
      %v895 = vld [vmem:[#allocation2 + $0x88] sm:$0x1f]
      %v896 = vld [vmem:[#allocation2 + $0x98] sm:$0x1f]
      %v897 = vld [vmem:[#allocation2 + $0xa8] sm:$0x1f]
      %v898 = vld [vmem:[#allocation2 + $0xb8] sm:$0x1f]
      %v899 = vld [vmem:[#allocation2 + $0xc8] sm:$0x1f]
      %v900 = vld [vmem:[#allocation2 + $0xd8] sm:$0x1f]
      %v901 = vld [vmem:[#allocation2 + $0xe8] sm:$0x1f]
      %v902 = vld [vmem:[#allocation2 + $0xf8] sm:$0x1f]
      %vm903 = vsmask.f32 3328
      %v905 = vshrl.u32 %v790, 16
      %v907 = vrot.slane %v905, 4
      %v908 = vshll.u32 %v790, 16
      %v910 = vrot.slane %v908, 5
      %v911 = vor.u32 %v907, %v910
      %v913 = vshrl.u32 %v887, 16
      %v915 = vrot.slane %v913, 4
      %v916 = vshll.u32 %v887, 16
      %v918 = vrot.slane %v916, 5
      %v919 = vor.u32 %v915, %v918
      %v920 = vsel %vm903, %v911, %v919
      %v922 = vshrl.u32 %v791, 16
      %v924 = vrot.slane %v922, 4
      %v925 = vshll.u32 %v791, 16
      %v927 = vrot.slane %v925, 5
      %v928 = vor.u32 %v924, %v927
      %v930 = vshrl.u32 %v888, 16
      %v932 = vrot.slane %v930, 4
      %v933 = vshll.u32 %v888, 16
      %v935 = vrot.slane %v933, 5
      %v936 = vor.u32 %v932, %v935
      %v937 = vsel %vm903, %v928, %v936
      %v939 = vshrl.u32 %v792, 16
      %v941 = vrot.slane %v939, 4
      %v942 = vshll.u32 %v792, 16
      %v944 = vrot.slane %v942, 5
      %v945 = vor.u32 %v941, %v944
      %v947 = vshrl.u32 %v889, 16
      %v949 = vrot.slane %v947, 4
      %v950 = vshll.u32 %v889, 16
      %v952 = vrot.slane %v950, 5
      %v953 = vor.u32 %v949, %v952
      %v954 = vsel %vm903, %v945, %v953
      %v956 = vshrl.u32 %v793, 16
      %v958 = vrot.slane %v956, 4
      %v959 = vshll.u32 %v793, 16
      %v961 = vrot.slane %v959, 5
      %v962 = vor.u32 %v958, %v961
      %v964 = vshrl.u32 %v890, 16
      %v966 = vrot.slane %v964, 4
      %v967 = vshll.u32 %v890, 16
      %v969 = vrot.slane %v967, 5
      %v970 = vor.u32 %v966, %v969
      %v971 = vsel %vm903, %v962, %v970
      %v973 = vshrl.u32 %v794, 16
      %v975 = vrot.slane %v973, 4
      %v976 = vshll.u32 %v794, 16
      %v978 = vrot.slane %v976, 5
      %v979 = vor.u32 %v975, %v978
      %v981 = vshrl.u32 %v891, 16
      %v983 = vrot.slane %v981, 4
      %v984 = vshll.u32 %v891, 16
      %v986 = vrot.slane %v984, 5
      %v987 = vor.u32 %v983, %v986
      %v988 = vsel %vm903, %v979, %v987
      %v990 = vshrl.u32 %v795, 16
      %v992 = vrot.slane %v990, 4
      %v993 = vshll.u32 %v795, 16
      %v995 = vrot.slane %v993, 5
      %v996 = vor.u32 %v992, %v995
      %v998 = vshrl.u32 %v892, 16
      %v1000 = vrot.slane %v998, 4
      %v1001 = vshll.u32 %v892, 16
      %v1003 = vrot.slane %v1001, 5
      %v1004 = vor.u32 %v1000, %v1003
      %v1005 = vsel %vm903, %v996, %v1004
      %v1007 = vshrl.u32 %v796, 16
      %v1009 = vrot.slane %v1007, 4
      %v1010 = vshll.u32 %v796, 16
      %v1012 = vrot.slane %v1010, 5
      %v1013 = vor.u32 %v1009, %v1012
      %v1015 = vshrl.u32 %v893, 16
      %v1017 = vrot.slane %v1015, 4
      %v1018 = vshll.u32 %v893, 16
      %v1020 = vrot.slane %v1018, 5
      %v1021 = vor.u32 %v1017, %v1020
      %v1022 = vsel %vm903, %v1013, %v1021
      %v1024 = vshrl.u32 %v797, 16
      %v1026 = vrot.slane %v1024, 4
      %v1027 = vshll.u32 %v797, 16
      %v1029 = vrot.slane %v1027, 5
      %v1030 = vor.u32 %v1026, %v1029
      %v1032 = vshrl.u32 %v894, 16
      %v1034 = vrot.slane %v1032, 4
      %v1035 = vshll.u32 %v894, 16
      %v1037 = vrot.slane %v1035, 5
      %v1038 = vor.u32 %v1034, %v1037
      %v1039 = vsel %vm903, %v1030, %v1038
      %v1041 = vshrl.u32 %v798, 16
      %v1043 = vrot.slane %v1041, 4
      %v1044 = vshll.u32 %v798, 16
      %v1046 = vrot.slane %v1044, 5
      %v1047 = vor.u32 %v1043, %v1046
      %v1049 = vshrl.u32 %v895, 16
      %v1051 = vrot.slane %v1049, 4
      %v1052 = vshll.u32 %v895, 16
      %v1054 = vrot.slane %v1052, 5
      %v1055 = vor.u32 %v1051, %v1054
      %v1056 = vsel %vm903, %v1047, %v1055
      %v1058 = vshrl.u32 %v799, 16
      %v1060 = vrot.slane %v1058, 4
      %v1061 = vshll.u32 %v799, 16
      %v1063 = vrot.slane %v1061, 5
      %v1064 = vor.u32 %v1060, %v1063
      %v1066 = vshrl.u32 %v896, 16
      %v1068 = vrot.slane %v1066, 4
      %v1069 = vshll.u32 %v896, 16
      %v1071 = vrot.slane %v1069, 5
      %v1072 = vor.u32 %v1068, %v1071
      %v1073 = vsel %vm903, %v1064, %v1072
      %v1075 = vshrl.u32 %v800, 16
      %v1077 = vrot.slane %v1075, 4
      %v1078 = vshll.u32 %v800, 16
      %v1080 = vrot.slane %v1078, 5
      %v1081 = vor.u32 %v1077, %v1080
      %v1083 = vshrl.u32 %v897, 16
      %v1085 = vrot.slane %v1083, 4
      %v1086 = vshll.u32 %v897, 16
      %v1088 = vrot.slane %v1086, 5
      %v1089 = vor.u32 %v1085, %v1088
      %v1090 = vsel %vm903, %v1081, %v1089
      %v1092 = vshrl.u32 %v801, 16
      %v1094 = vrot.slane %v1092, 4
      %v1095 = vshll.u32 %v801, 16
      %v1097 = vrot.slane %v1095, 5
      %v1098 = vor.u32 %v1094, %v1097
      %v1100 = vshrl.u32 %v898, 16
      %v1102 = vrot.slane %v1100, 4
      %v1103 = vshll.u32 %v898, 16
      %v1105 = vrot.slane %v1103, 5
      %v1106 = vor.u32 %v1102, %v1105
      %v1107 = vsel %vm903, %v1098, %v1106
      %v1109 = vshrl.u32 %v802, 16
      %v1111 = vrot.slane %v1109, 4
      %v1112 = vshll.u32 %v802, 16
      %v1114 = vrot.slane %v1112, 5
      %v1115 = vor.u32 %v1111, %v1114
      %v1117 = vshrl.u32 %v899, 16
      %v1119 = vrot.slane %v1117, 4
      %v1120 = vshll.u32 %v899, 16
      %v1122 = vrot.slane %v1120, 5
      %v1123 = vor.u32 %v1119, %v1122
      %v1124 = vsel %vm903, %v1115, %v1123
      %v1126 = vshrl.u32 %v803, 16
      %v1128 = vrot.slane %v1126, 4
      %v1129 = vshll.u32 %v803, 16
      %v1131 = vrot.slane %v1129, 5
      %v1132 = vor.u32 %v1128, %v1131
      %v1134 = vshrl.u32 %v900, 16
      %v1136 = vrot.slane %v1134, 4
      %v1137 = vshll.u32 %v900, 16
      %v1139 = vrot.slane %v1137, 5
      %v1140 = vor.u32 %v1136, %v1139
      %v1141 = vsel %vm903, %v1132, %v1140
      %v1143 = vshrl.u32 %v804, 16
      %v1145 = vrot.slane %v1143, 4
      %v1146 = vshll.u32 %v804, 16
      %v1148 = vrot.slane %v1146, 5
      %v1149 = vor.u32 %v1145, %v1148
      %v1151 = vshrl.u32 %v901, 16
      %v1153 = vrot.slane %v1151, 4
      %v1154 = vshll.u32 %v901, 16
      %v1156 = vrot.slane %v1154, 5
      %v1157 = vor.u32 %v1153, %v1156
      %v1158 = vsel %vm903, %v1149, %v1157
      %v1160 = vshrl.u32 %v805, 16
      %v1162 = vrot.slane %v1160, 4
      %v1163 = vshll.u32 %v805, 16
      %v1165 = vrot.slane %v1163, 5
      %v1166 = vor.u32 %v1162, %v1165
      %v1168 = vshrl.u32 %v902, 16
      %v1170 = vrot.slane %v1168, 4
      %v1171 = vshll.u32 %v902, 16
      %v1173 = vrot.slane %v1171, 5
      %v1174 = vor.u32 %v1170, %v1173
      %v1175 = vsel %vm903, %v1166, %v1174
      %v1176 = vld [vmem:[%s191] sm:$0xf8]
      %v1177 = vld [vmem:[%s191 + $0x8] sm:$0xf]
      %v1178 = vld [vmem:[%s191 + $0x10] sm:$0xf8]
      %v1179 = vld [vmem:[%s191 + $0x18] sm:$0xf]
      %v1180 = vld [vmem:[%s191 + $0x20] sm:$0xf8]
      %v1181 = vld [vmem:[%s191 + $0x28] sm:$0xf]
      %v1182 = vld [vmem:[%s191 + $0x30] sm:$0xf8]
      %v1183 = vld [vmem:[%s191 + $0x38] sm:$0xf]
      %v1184 = vld [vmem:[%s191 + $0x40] sm:$0xf8]
      %v1185 = vld [vmem:[%s191 + $0x48] sm:$0xf]
      %v1186 = vld [vmem:[%s191 + $0x50] sm:$0xf8]
      %v1187 = vld [vmem:[%s191 + $0x58] sm:$0xf]
      %v1188 = vld [vmem:[%s191 + $0x60] sm:$0xf8]
      %v1189 = vld [vmem:[%s191 + $0x68] sm:$0xf]
      %v1190 = vld [vmem:[%s191 + $0x70] sm:$0xf8]
      %v1191 = vld [vmem:[%s191 + $0x78] sm:$0xf]
      %v1192 = vld [vmem:[%s191 + $0x80] sm:$0xf8]
      %v1193 = vld [vmem:[%s191 + $0x88] sm:$0xf]
      %v1194 = vld [vmem:[%s191 + $0x90] sm:$0xf8]
      %v1195 = vld [vmem:[%s191 + $0x98] sm:$0xf]
      %v1196 = vld [vmem:[%s191 + $0xa0] sm:$0xf8]
      %v1197 = vld [vmem:[%s191 + $0xa8] sm:$0xf]
      %v1198 = vld [vmem:[%s191 + $0xb0] sm:$0xf8]
      %v1199 = vld [vmem:[%s191 + $0xb8] sm:$0xf]
      %v1200 = vld [vmem:[%s191 + $0xc0] sm:$0xf8]
      %v1201 = vld [vmem:[%s191 + $0xc8] sm:$0xf]
      %v1202 = vld [vmem:[%s191 + $0xd0] sm:$0xf8]
      %v1203 = vld [vmem:[%s191 + $0xd8] sm:$0xf]
      %v1204 = vld [vmem:[%s191 + $0xe0] sm:$0xf8]
      %v1205 = vld [vmem:[%s191 + $0xe8] sm:$0xf]
      %v1206 = vld [vmem:[%s191 + $0xf0] sm:$0xf8]
      %v1207 = vld [vmem:[%s191 + $0xf8] sm:$0xf]
      %v1209 = vshrl.u32 %v1176, 16
      %v1211 = vrot.slane %v1209, 3
      %v1212 = vshll.u32 %v1176, 16
      %v1214 = vrot.slane %v1212, 4
      %v1215 = vor.u32 %v1211, %v1214
      %v1217 = vshrl.u32 %v1177, 16
      %v1219 = vrot.slane %v1217, 3
      %v1220 = vshll.u32 %v1177, 16
      %v1222 = vrot.slane %v1220, 4
      %v1223 = vor.u32 %v1219, %v1222
      %v1224 = vsel %vm179, %v1215, %v1223
      %v1226 = vshrl.u32 %v1178, 16
      %v1228 = vrot.slane %v1226, 3
      %v1229 = vshll.u32 %v1178, 16
      %v1231 = vrot.slane %v1229, 4
      %v1232 = vor.u32 %v1228, %v1231
      %v1234 = vshrl.u32 %v1179, 16
      %v1236 = vrot.slane %v1234, 3
      %v1237 = vshll.u32 %v1179, 16
      %v1239 = vrot.slane %v1237, 4
      %v1240 = vor.u32 %v1236, %v1239
      %v1241 = vsel %vm179, %v1232, %v1240
      %v1243 = vshrl.u32 %v1180, 16
      %v1245 = vrot.slane %v1243, 3
      %v1246 = vshll.u32 %v1180, 16
      %v1248 = vrot.slane %v1246, 4
      %v1249 = vor.u32 %v1245, %v1248
      %v1251 = vshrl.u32 %v1181, 16
      %v1253 = vrot.slane %v1251, 3
      %v1254 = vshll.u32 %v1181, 16
      %v1256 = vrot.slane %v1254, 4
      %v1257 = vor.u32 %v1253, %v1256
      %v1258 = vsel %vm179, %v1249, %v1257
      %v1260 = vshrl.u32 %v1182, 16
      %v1262 = vrot.slane %v1260, 3
      %v1263 = vshll.u32 %v1182, 16
      %v1265 = vrot.slane %v1263, 4
      %v1266 = vor.u32 %v1262, %v1265
      %v1268 = vshrl.u32 %v1183, 16
      %v1270 = vrot.slane %v1268, 3
      %v1271 = vshll.u32 %v1183, 16
      %v1273 = vrot.slane %v1271, 4
      %v1274 = vor.u32 %v1270, %v1273
      %v1275 = vsel %vm179, %v1266, %v1274
      %v1277 = vshrl.u32 %v1184, 16
      %v1279 = vrot.slane %v1277, 3
      %v1280 = vshll.u32 %v1184, 16
      %v1282 = vrot.slane %v1280, 4
      %v1283 = vor.u32 %v1279, %v1282
      %v1285 = vshrl.u32 %v1185, 16
      %v1287 = vrot.slane %v1285, 3
      %v1288 = vshll.u32 %v1185, 16
      %v1290 = vrot.slane %v1288, 4
      %v1291 = vor.u32 %v1287, %v1290
      %v1292 = vsel %vm179, %v1283, %v1291
      %v1294 = vshrl.u32 %v1186, 16
      %v1296 = vrot.slane %v1294, 3
      %v1297 = vshll.u32 %v1186, 16
      %v1299 = vrot.slane %v1297, 4
      %v1300 = vor.u32 %v1296, %v1299
      %v1302 = vshrl.u32 %v1187, 16
      %v1304 = vrot.slane %v1302, 3
      %v1305 = vshll.u32 %v1187, 16
      %v1307 = vrot.slane %v1305, 4
      %v1308 = vor.u32 %v1304, %v1307
      %v1309 = vsel %vm179, %v1300, %v1308
      %v1311 = vshrl.u32 %v1188, 16
      %v1313 = vrot.slane %v1311, 3
      %v1314 = vshll.u32 %v1188, 16
      %v1316 = vrot.slane %v1314, 4
      %v1317 = vor.u32 %v1313, %v1316
      %v1319 = vshrl.u32 %v1189, 16
      %v1321 = vrot.slane %v1319, 3
      %v1322 = vshll.u32 %v1189, 16
      %v1324 = vrot.slane %v1322, 4
      %v1325 = vor.u32 %v1321, %v1324
      %v1326 = vsel %vm179, %v1317, %v1325
      %v1328 = vshrl.u32 %v1190, 16
      %v1330 = vrot.slane %v1328, 3
      %v1331 = vshll.u32 %v1190, 16
      %v1333 = vrot.slane %v1331, 4
      %v1334 = vor.u32 %v1330, %v1333
      %v1336 = vshrl.u32 %v1191, 16
      %v1338 = vrot.slane %v1336, 3
      %v1339 = vshll.u32 %v1191, 16
      %v1341 = vrot.slane %v1339, 4
      %v1342 = vor.u32 %v1338, %v1341
      %v1343 = vsel %vm179, %v1334, %v1342
      %v1345 = vshrl.u32 %v1192, 16
      %v1347 = vrot.slane %v1345, 3
      %v1348 = vshll.u32 %v1192, 16
      %v1350 = vrot.slane %v1348, 4
      %v1351 = vor.u32 %v1347, %v1350
      %v1353 = vshrl.u32 %v1193, 16
      %v1355 = vrot.slane %v1353, 3
      %v1356 = vshll.u32 %v1193, 16
      %v1358 = vrot.slane %v1356, 4
      %v1359 = vor.u32 %v1355, %v1358
      %v1360 = vsel %vm179, %v1351, %v1359
      %v1362 = vshrl.u32 %v1194, 16
      %v1364 = vrot.slane %v1362, 3
      %v1365 = vshll.u32 %v1194, 16
      %v1367 = vrot.slane %v1365, 4
      %v1368 = vor.u32 %v1364, %v1367
      %v1370 = vshrl.u32 %v1195, 16
      %v1372 = vrot.slane %v1370, 3
      %v1373 = vshll.u32 %v1195, 16
      %v1375 = vrot.slane %v1373, 4
      %v1376 = vor.u32 %v1372, %v1375
      %v1377 = vsel %vm179, %v1368, %v1376
      %v1379 = vshrl.u32 %v1196, 16
      %v1381 = vrot.slane %v1379, 3
      %v1382 = vshll.u32 %v1196, 16
      %v1384 = vrot.slane %v1382, 4
      %v1385 = vor.u32 %v1381, %v1384
      %v1387 = vshrl.u32 %v1197, 16
      %v1389 = vrot.slane %v1387, 3
      %v1390 = vshll.u32 %v1197, 16
      %v1392 = vrot.slane %v1390, 4
      %v1393 = vor.u32 %v1389, %v1392
      %v1394 = vsel %vm179, %v1385, %v1393
      %v1396 = vshrl.u32 %v1198, 16
      %v1398 = vrot.slane %v1396, 3
      %v1399 = vshll.u32 %v1198, 16
      %v1401 = vrot.slane %v1399, 4
      %v1402 = vor.u32 %v1398, %v1401
      %v1404 = vshrl.u32 %v1199, 16
      %v1406 = vrot.slane %v1404, 3
      %v1407 = vshll.u32 %v1199, 16
      %v1409 = vrot.slane %v1407, 4
      %v1410 = vor.u32 %v1406, %v1409
      %v1411 = vsel %vm179, %v1402, %v1410
      %v1413 = vshrl.u32 %v1200, 16
      %v1415 = vrot.slane %v1413, 3
      %v1416 = vshll.u32 %v1200, 16
      %v1418 = vrot.slane %v1416, 4
      %v1419 = vor.u32 %v1415, %v1418
      %v1421 = vshrl.u32 %v1201, 16
      %v1423 = vrot.slane %v1421, 3
      %v1424 = vshll.u32 %v1201, 16
      %v1426 = vrot.slane %v1424, 4
      %v1427 = vor.u32 %v1423, %v1426
      %v1428 = vsel %vm179, %v1419, %v1427
      %v1430 = vshrl.u32 %v1202, 16
      %v1432 = vrot.slane %v1430, 3
      %v1433 = vshll.u32 %v1202, 16
      %v1435 = vrot.slane %v1433, 4
      %v1436 = vor.u32 %v1432, %v1435
      %v1438 = vshrl.u32 %v1203, 16
      %v1440 = vrot.slane %v1438, 3
      %v1441 = vshll.u32 %v1203, 16
      %v1443 = vrot.slane %v1441, 4
      %v1444 = vor.u32 %v1440, %v1443
      %v1445 = vsel %vm179, %v1436, %v1444
      %v1447 = vshrl.u32 %v1204, 16
      %v1449 = vrot.slane %v1447, 3
      %v1450 = vshll.u32 %v1204, 16
      %v1452 = vrot.slane %v1450, 4
      %v1453 = vor.u32 %v1449, %v1452
      %v1455 = vshrl.u32 %v1205, 16
      %v1457 = vrot.slane %v1455, 3
      %v1458 = vshll.u32 %v1205, 16
      %v1460 = vrot.slane %v1458, 4
      %v1461 = vor.u32 %v1457, %v1460
      %v1462 = vsel %vm179, %v1453, %v1461
      %v1464 = vshrl.u32 %v1206, 16
      %v1466 = vrot.slane %v1464, 3
      %v1467 = vshll.u32 %v1206, 16
      %v1469 = vrot.slane %v1467, 4
      %v1470 = vor.u32 %v1466, %v1469
      %v1472 = vshrl.u32 %v1207, 16
      %v1474 = vrot.slane %v1472, 3
      %v1475 = vshll.u32 %v1207, 16
      %v1477 = vrot.slane %v1475, 4
      %v1478 = vor.u32 %v1474, %v1477
      %v1479 = vsel %vm179, %v1470, %v1478
      %v1480 = vld [vmem:[%s191] sm:$0xf0]
      %v1481 = vld [vmem:[%s191 + $0x10] sm:$0xf0]
      %v1482 = vld [vmem:[%s191 + $0x20] sm:$0xf0]
      %v1483 = vld [vmem:[%s191 + $0x30] sm:$0xf0]
      %v1484 = vld [vmem:[%s191 + $0x40] sm:$0xf0]
      %v1485 = vld [vmem:[%s191 + $0x50] sm:$0xf0]
      %v1486 = vld [vmem:[%s191 + $0x60] sm:$0xf0]
      %v1487 = vld [vmem:[%s191 + $0x70] sm:$0xf0]
      %v1488 = vld [vmem:[%s191 + $0x80] sm:$0xf0]
      %v1489 = vld [vmem:[%s191 + $0x90] sm:$0xf0]
      %v1490 = vld [vmem:[%s191 + $0xa0] sm:$0xf0]
      %v1491 = vld [vmem:[%s191 + $0xb0] sm:$0xf0]
      %v1492 = vld [vmem:[%s191 + $0xc0] sm:$0xf0]
      %v1493 = vld [vmem:[%s191 + $0xd0] sm:$0xf0]
      %v1494 = vld [vmem:[%s191 + $0xe0] sm:$0xf0]
      %v1495 = vld [vmem:[%s191 + $0xf0] sm:$0xf0]
      %v1528 = vrot.slane %v1480, 4
      %v1529 = vrot.slane %v1177, 4
      %v1530 = vsel %vm838, %v1528, %v1529
      %v1531 = vrot.slane %v1481, 4
      %v1532 = vrot.slane %v1179, 4
      %v1533 = vsel %vm838, %v1531, %v1532
      %v1534 = vrot.slane %v1482, 4
      %v1535 = vrot.slane %v1181, 4
      %v1536 = vsel %vm838, %v1534, %v1535
      %v1537 = vrot.slane %v1483, 4
      %v1538 = vrot.slane %v1183, 4
      %v1539 = vsel %vm838, %v1537, %v1538
      %v1540 = vrot.slane %v1484, 4
      %v1541 = vrot.slane %v1185, 4
      %v1542 = vsel %vm838, %v1540, %v1541
      %v1543 = vrot.slane %v1485, 4
      %v1544 = vrot.slane %v1187, 4
      %v1545 = vsel %vm838, %v1543, %v1544
      %v1546 = vrot.slane %v1486, 4
      %v1547 = vrot.slane %v1189, 4
      %v1548 = vsel %vm838, %v1546, %v1547
      %v1549 = vrot.slane %v1487, 4
      %v1550 = vrot.slane %v1191, 4
      %v1551 = vsel %vm838, %v1549, %v1550
      %v1552 = vrot.slane %v1488, 4
      %v1553 = vrot.slane %v1193, 4
      %v1554 = vsel %vm838, %v1552, %v1553
      %v1555 = vrot.slane %v1489, 4
      %v1556 = vrot.slane %v1195, 4
      %v1557 = vsel %vm838, %v1555, %v1556
      %v1558 = vrot.slane %v1490, 4
      %v1559 = vrot.slane %v1197, 4
      %v1560 = vsel %vm838, %v1558, %v1559
      %v1561 = vrot.slane %v1491, 4
      %v1562 = vrot.slane %v1199, 4
      %v1563 = vsel %vm838, %v1561, %v1562
      %v1564 = vrot.slane %v1492, 4
      %v1565 = vrot.slane %v1201, 4
      %v1566 = vsel %vm838, %v1564, %v1565
      %v1567 = vrot.slane %v1493, 4
      %v1568 = vrot.slane %v1203, 4
      %v1569 = vsel %vm838, %v1567, %v1568
      %v1570 = vrot.slane %v1494, 4
      %v1571 = vrot.slane %v1205, 4
      %v1572 = vsel %vm838, %v1570, %v1571
      %v1573 = vrot.slane %v1495, 4
      %v1574 = vrot.slane %v1207, 4
      %v1575 = vsel %vm838, %v1573, %v1574
      %v1576 = vld [vmem:[%s191 + $0x8] sm:$0x1f]
      %v1577 = vld [vmem:[%s191 + $0x18] sm:$0x1f]
      %v1578 = vld [vmem:[%s191 + $0x28] sm:$0x1f]
      %v1579 = vld [vmem:[%s191 + $0x38] sm:$0x1f]
      %v1580 = vld [vmem:[%s191 + $0x48] sm:$0x1f]
      %v1581 = vld [vmem:[%s191 + $0x58] sm:$0x1f]
      %v1582 = vld [vmem:[%s191 + $0x68] sm:$0x1f]
      %v1583 = vld [vmem:[%s191 + $0x78] sm:$0x1f]
      %v1584 = vld [vmem:[%s191 + $0x88] sm:$0x1f]
      %v1585 = vld [vmem:[%s191 + $0x98] sm:$0x1f]
      %v1586 = vld [vmem:[%s191 + $0xa8] sm:$0x1f]
      %v1587 = vld [vmem:[%s191 + $0xb8] sm:$0x1f]
      %v1588 = vld [vmem:[%s191 + $0xc8] sm:$0x1f]
      %v1589 = vld [vmem:[%s191 + $0xd8] sm:$0x1f]
      %v1590 = vld [vmem:[%s191 + $0xe8] sm:$0x1f]
      %v1591 = vld [vmem:[%s191 + $0xf8] sm:$0x1f]
      %v1593 = vshrl.u32 %v1480, 16
      %v1595 = vrot.slane %v1593, 4
      %v1596 = vshll.u32 %v1480, 16
      %v1598 = vrot.slane %v1596, 5
      %v1599 = vor.u32 %v1595, %v1598
      %v1601 = vshrl.u32 %v1576, 16
      %v1603 = vrot.slane %v1601, 4
      %v1604 = vshll.u32 %v1576, 16
      %v1606 = vrot.slane %v1604, 5
      %v1607 = vor.u32 %v1603, %v1606
      %v1608 = vsel %vm903, %v1599, %v1607
      %v1610 = vshrl.u32 %v1481, 16
      %v1612 = vrot.slane %v1610, 4
      %v1613 = vshll.u32 %v1481, 16
      %v1615 = vrot.slane %v1613, 5
      %v1616 = vor.u32 %v1612, %v1615
      %v1618 = vshrl.u32 %v1577, 16
      %v1620 = vrot.slane %v1618, 4
      %v1621 = vshll.u32 %v1577, 16
      %v1623 = vrot.slane %v1621, 5
      %v1624 = vor.u32 %v1620, %v1623
      %v1625 = vsel %vm903, %v1616, %v1624
      %v1627 = vshrl.u32 %v1482, 16
      %v1629 = vrot.slane %v1627, 4
      %v1630 = vshll.u32 %v1482, 16
      %v1632 = vrot.slane %v1630, 5
      %v1633 = vor.u32 %v1629, %v1632
      %v1635 = vshrl.u32 %v1578, 16
      %v1637 = vrot.slane %v1635, 4
      %v1638 = vshll.u32 %v1578, 16
      %v1640 = vrot.slane %v1638, 5
      %v1641 = vor.u32 %v1637, %v1640
      %v1642 = vsel %vm903, %v1633, %v1641
      %v1644 = vshrl.u32 %v1483, 16
      %v1646 = vrot.slane %v1644, 4
      %v1647 = vshll.u32 %v1483, 16
      %v1649 = vrot.slane %v1647, 5
      %v1650 = vor.u32 %v1646, %v1649
      %v1652 = vshrl.u32 %v1579, 16
      %v1654 = vrot.slane %v1652, 4
      %v1655 = vshll.u32 %v1579, 16
      %v1657 = vrot.slane %v1655, 5
      %v1658 = vor.u32 %v1654, %v1657
      %v1659 = vsel %vm903, %v1650, %v1658
      %v1661 = vshrl.u32 %v1484, 16
      %v1663 = vrot.slane %v1661, 4
      %v1664 = vshll.u32 %v1484, 16
      %v1666 = vrot.slane %v1664, 5
      %v1667 = vor.u32 %v1663, %v1666
      %v1669 = vshrl.u32 %v1580, 16
      %v1671 = vrot.slane %v1669, 4
      %v1672 = vshll.u32 %v1580, 16
      %v1674 = vrot.slane %v1672, 5
      %v1675 = vor.u32 %v1671, %v1674
      %v1676 = vsel %vm903, %v1667, %v1675
      %v1678 = vshrl.u32 %v1485, 16
      %v1680 = vrot.slane %v1678, 4
      %v1681 = vshll.u32 %v1485, 16
      %v1683 = vrot.slane %v1681, 5
      %v1684 = vor.u32 %v1680, %v1683
      %v1686 = vshrl.u32 %v1581, 16
      %v1688 = vrot.slane %v1686, 4
      %v1689 = vshll.u32 %v1581, 16
      %v1691 = vrot.slane %v1689, 5
      %v1692 = vor.u32 %v1688, %v1691
      %v1693 = vsel %vm903, %v1684, %v1692
      %v1695 = vshrl.u32 %v1486, 16
      %v1697 = vrot.slane %v1695, 4
      %v1698 = vshll.u32 %v1486, 16
      %v1700 = vrot.slane %v1698, 5
      %v1701 = vor.u32 %v1697, %v1700
      %v1703 = vshrl.u32 %v1582, 16
      %v1705 = vrot.slane %v1703, 4
      %v1706 = vshll.u32 %v1582, 16
      %v1708 = vrot.slane %v1706, 5
      %v1709 = vor.u32 %v1705, %v1708
      %v1710 = vsel %vm903, %v1701, %v1709
      %v1712 = vshrl.u32 %v1487, 16
      %v1714 = vrot.slane %v1712, 4
      %v1715 = vshll.u32 %v1487, 16
      %v1717 = vrot.slane %v1715, 5
      %v1718 = vor.u32 %v1714, %v1717
      %v1720 = vshrl.u32 %v1583, 16
      %v1722 = vrot.slane %v1720, 4
      %v1723 = vshll.u32 %v1583, 16
      %v1725 = vrot.slane %v1723, 5
      %v1726 = vor.u32 %v1722, %v1725
      %v1727 = vsel %vm903, %v1718, %v1726
      %v1729 = vshrl.u32 %v1488, 16
      %v1731 = vrot.slane %v1729, 4
      %v1732 = vshll.u32 %v1488, 16
      %v1734 = vrot.slane %v1732, 5
      %v1735 = vor.u32 %v1731, %v1734
      %v1737 = vshrl.u32 %v1584, 16
      %v1739 = vrot.slane %v1737, 4
      %v1740 = vshll.u32 %v1584, 16
      %v1742 = vrot.slane %v1740, 5
      %v1743 = vor.u32 %v1739, %v1742
      %v1744 = vsel %vm903, %v1735, %v1743
      %v1746 = vshrl.u32 %v1489, 16
      %v1748 = vrot.slane %v1746, 4
      %v1749 = vshll.u32 %v1489, 16
      %v1751 = vrot.slane %v1749, 5
      %v1752 = vor.u32 %v1748, %v1751
      %v1754 = vshrl.u32 %v1585, 16
      %v1756 = vrot.slane %v1754, 4
      %v1757 = vshll.u32 %v1585, 16
      %v1759 = vrot.slane %v1757, 5
      %v1760 = vor.u32 %v1756, %v1759
      %v1761 = vsel %vm903, %v1752, %v1760
      %v1763 = vshrl.u32 %v1490, 16
      %v1765 = vrot.slane %v1763, 4
      %v1766 = vshll.u32 %v1490, 16
      %v1768 = vrot.slane %v1766, 5
      %v1769 = vor.u32 %v1765, %v1768
      %v1771 = vshrl.u32 %v1586, 16
      %v1773 = vrot.slane %v1771, 4
      %v1774 = vshll.u32 %v1586, 16
      %v1776 = vrot.slane %v1774, 5
      %v1777 = vor.u32 %v1773, %v1776
      %v1778 = vsel %vm903, %v1769, %v1777
      %v1780 = vshrl.u32 %v1491, 16
      %v1782 = vrot.slane %v1780, 4
      %v1783 = vshll.u32 %v1491, 16
      %v1785 = vrot.slane %v1783, 5
      %v1786 = vor.u32 %v1782, %v1785
      %v1788 = vshrl.u32 %v1587, 16
      %v1790 = vrot.slane %v1788, 4
      %v1791 = vshll.u32 %v1587, 16
      %v1793 = vrot.slane %v1791, 5
      %v1794 = vor.u32 %v1790, %v1793
      %v1795 = vsel %vm903, %v1786, %v1794
      %v1797 = vshrl.u32 %v1492, 16
      %v1799 = vrot.slane %v1797, 4
      %v1800 = vshll.u32 %v1492, 16
      %v1802 = vrot.slane %v1800, 5
      %v1803 = vor.u32 %v1799, %v1802
      %v1805 = vshrl.u32 %v1588, 16
      %v1807 = vrot.slane %v1805, 4
      %v1808 = vshll.u32 %v1588, 16
      %v1810 = vrot.slane %v1808, 5
      %v1811 = vor.u32 %v1807, %v1810
      %v1812 = vsel %vm903, %v1803, %v1811
      %v1814 = vshrl.u32 %v1493, 16
      %v1816 = vrot.slane %v1814, 4
      %v1817 = vshll.u32 %v1493, 16
      %v1819 = vrot.slane %v1817, 5
      %v1820 = vor.u32 %v1816, %v1819
      %v1822 = vshrl.u32 %v1589, 16
      %v1824 = vrot.slane %v1822, 4
      %v1825 = vshll.u32 %v1589, 16
      %v1827 = vrot.slane %v1825, 5
      %v1828 = vor.u32 %v1824, %v1827
      %v1829 = vsel %vm903, %v1820, %v1828
      %v1831 = vshrl.u32 %v1494, 16
      %v1833 = vrot.slane %v1831, 4
      %v1834 = vshll.u32 %v1494, 16
      %v1836 = vrot.slane %v1834, 5
      %v1837 = vor.u32 %v1833, %v1836
      %v1839 = vshrl.u32 %v1590, 16
      %v1841 = vrot.slane %v1839, 4
      %v1842 = vshll.u32 %v1590, 16
      %v1844 = vrot.slane %v1842, 5
      %v1845 = vor.u32 %v1841, %v1844
      %v1846 = vsel %vm903, %v1837, %v1845
      %v1848 = vshrl.u32 %v1495, 16
      %v1850 = vrot.slane %v1848, 4
      %v1851 = vshll.u32 %v1495, 16
      %v1853 = vrot.slane %v1851, 5
      %v1854 = vor.u32 %v1850, %v1853
      %v1856 = vshrl.u32 %v1591, 16
      %v1858 = vrot.slane %v1856, 4
      %v1859 = vshll.u32 %v1591, 16
      %v1861 = vrot.slane %v1859, 5
      %v1862 = vor.u32 %v1858, %v1861
      %v1863 = vsel %vm903, %v1854, %v1862
      %s1864 = scalar_lea.vmem [#allocation2], 32
      %v1865 = vld [vmem:[%s1864] sm:$0xf8]
      %v1866 = vld [vmem:[%s1864 + $0x8] sm:$0xf]
      %v1867 = vld [vmem:[%s1864 + $0x10] sm:$0xf8]
      %v1868 = vld [vmem:[%s1864 + $0x18] sm:$0xf]
      %v1869 = vld [vmem:[%s1864 + $0x20] sm:$0xf8]
      %v1870 = vld [vmem:[%s1864 + $0x28] sm:$0xf]
      %v1871 = vld [vmem:[%s1864 + $0x30] sm:$0xf8]
      %v1872 = vld [vmem:[%s1864 + $0x38] sm:$0xf]
      %v1873 = vld [vmem:[%s1864 + $0x40] sm:$0xf8]
      %v1874 = vld [vmem:[%s1864 + $0x48] sm:$0xf]
      %v1875 = vld [vmem:[%s1864 + $0x50] sm:$0xf8]
      %v1876 = vld [vmem:[%s1864 + $0x58] sm:$0xf]
      %v1877 = vld [vmem:[%s1864 + $0x60] sm:$0xf8]
      %v1878 = vld [vmem:[%s1864 + $0x68] sm:$0xf]
      %v1879 = vld [vmem:[%s1864 + $0x70] sm:$0xf8]
      %v1880 = vld [vmem:[%s1864 + $0x78] sm:$0xf]
      %v1881 = vld [vmem:[%s1864 + $0x80] sm:$0xf8]
      %v1882 = vld [vmem:[%s1864 + $0x88] sm:$0xf]
      %v1883 = vld [vmem:[%s1864 + $0x90] sm:$0xf8]
      %v1884 = vld [vmem:[%s1864 + $0x98] sm:$0xf]
      %v1885 = vld [vmem:[%s1864 + $0xa0] sm:$0xf8]
      %v1886 = vld [vmem:[%s1864 + $0xa8] sm:$0xf]
      %v1887 = vld [vmem:[%s1864 + $0xb0] sm:$0xf8]
      %v1888 = vld [vmem:[%s1864 + $0xb8] sm:$0xf]
      %v1889 = vld [vmem:[%s1864 + $0xc0] sm:$0xf8]
      %v1890 = vld [vmem:[%s1864 + $0xc8] sm:$0xf]
      %v1891 = vld [vmem:[%s1864 + $0xd0] sm:$0xf8]
      %v1892 = vld [vmem:[%s1864 + $0xd8] sm:$0xf]
      %v1893 = vld [vmem:[%s1864 + $0xe0] sm:$0xf8]
      %v1894 = vld [vmem:[%s1864 + $0xe8] sm:$0xf]
      %v1895 = vld [vmem:[%s1864 + $0xf0] sm:$0xf8]
      %v1896 = vld [vmem:[%s1864 + $0xf8] sm:$0xf]
      %v1898 = vshrl.u32 %v1865, 16
      %v1900 = vrot.slane %v1898, 3
      %v1901 = vshll.u32 %v1865, 16
      %v1903 = vrot.slane %v1901, 4
      %v1904 = vor.u32 %v1900, %v1903
      %v1906 = vshrl.u32 %v1866, 16
      %v1908 = vrot.slane %v1906, 3
      %v1909 = vshll.u32 %v1866, 16
      %v1911 = vrot.slane %v1909, 4
      %v1912 = vor.u32 %v1908, %v1911
      %v1913 = vsel %vm179, %v1904, %v1912
      %v1915 = vshrl.u32 %v1867, 16
      %v1917 = vrot.slane %v1915, 3
      %v1918 = vshll.u32 %v1867, 16
      %v1920 = vrot.slane %v1918, 4
      %v1921 = vor.u32 %v1917, %v1920
      %v1923 = vshrl.u32 %v1868, 16
      %v1925 = vrot.slane %v1923, 3
      %v1926 = vshll.u32 %v1868, 16
      %v1928 = vrot.slane %v1926, 4
      %v1929 = vor.u32 %v1925, %v1928
      %v1930 = vsel %vm179, %v1921, %v1929
      %v1932 = vshrl.u32 %v1869, 16
      %v1934 = vrot.slane %v1932, 3
      %v1935 = vshll.u32 %v1869, 16
      %v1937 = vrot.slane %v1935, 4
      %v1938 = vor.u32 %v1934, %v1937
      %v1940 = vshrl.u32 %v1870, 16
      %v1942 = vrot.slane %v1940, 3
      %v1943 = vshll.u32 %v1870, 16
      %v1945 = vrot.slane %v1943, 4
      %v1946 = vor.u32 %v1942, %v1945
      %v1947 = vsel %vm179, %v1938, %v1946
      %v1949 = vshrl.u32 %v1871, 16
      %v1951 = vrot.slane %v1949, 3
      %v1952 = vshll.u32 %v1871, 16
      %v1954 = vrot.slane %v1952, 4
      %v1955 = vor.u32 %v1951, %v1954
      %v1957 = vshrl.u32 %v1872, 16
      %v1959 = vrot.slane %v1957, 3
      %v1960 = vshll.u32 %v1872, 16
      %v1962 = vrot.slane %v1960, 4
      %v1963 = vor.u32 %v1959, %v1962
      %v1964 = vsel %vm179, %v1955, %v1963
      %v1966 = vshrl.u32 %v1873, 16
      %v1968 = vrot.slane %v1966, 3
      %v1969 = vshll.u32 %v1873, 16
      %v1971 = vrot.slane %v1969, 4
      %v1972 = vor.u32 %v1968, %v1971
      %v1974 = vshrl.u32 %v1874, 16
      %v1976 = vrot.slane %v1974, 3
      %v1977 = vshll.u32 %v1874, 16
      %v1979 = vrot.slane %v1977, 4
      %v1980 = vor.u32 %v1976, %v1979
      %v1981 = vsel %vm179, %v1972, %v1980
      %v1983 = vshrl.u32 %v1875, 16
      %v1985 = vrot.slane %v1983, 3
      %v1986 = vshll.u32 %v1875, 16
      %v1988 = vrot.slane %v1986, 4
      %v1989 = vor.u32 %v1985, %v1988
      %v1991 = vshrl.u32 %v1876, 16
      %v1993 = vrot.slane %v1991, 3
      %v1994 = vshll.u32 %v1876, 16
      %v1996 = vrot.slane %v1994, 4
      %v1997 = vor.u32 %v1993, %v1996
      %v1998 = vsel %vm179, %v1989, %v1997
      %v2000 = vshrl.u32 %v1877, 16
      %v2002 = vrot.slane %v2000, 3
      %v2003 = vshll.u32 %v1877, 16
      %v2005 = vrot.slane %v2003, 4
      %v2006 = vor.u32 %v2002, %v2005
      %v2008 = vshrl.u32 %v1878, 16
      %v2010 = vrot.slane %v2008, 3
      %v2011 = vshll.u32 %v1878, 16
      %v2013 = vrot.slane %v2011, 4
      %v2014 = vor.u32 %v2010, %v2013
      %v2015 = vsel %vm179, %v2006, %v2014
      %v2017 = vshrl.u32 %v1879, 16
      %v2019 = vrot.slane %v2017, 3
      %v2020 = vshll.u32 %v1879, 16
      %v2022 = vrot.slane %v2020, 4
      %v2023 = vor.u32 %v2019, %v2022
      %v2025 = vshrl.u32 %v1880, 16
      %v2027 = vrot.slane %v2025, 3
      %v2028 = vshll.u32 %v1880, 16
      %v2030 = vrot.slane %v2028, 4
      %v2031 = vor.u32 %v2027, %v2030
      %v2032 = vsel %vm179, %v2023, %v2031
      %v2034 = vshrl.u32 %v1881, 16
      %v2036 = vrot.slane %v2034, 3
      %v2037 = vshll.u32 %v1881, 16
      %v2039 = vrot.slane %v2037, 4
      %v2040 = vor.u32 %v2036, %v2039
      %v2042 = vshrl.u32 %v1882, 16
      %v2044 = vrot.slane %v2042, 3
      %v2045 = vshll.u32 %v1882, 16
      %v2047 = vrot.slane %v2045, 4
      %v2048 = vor.u32 %v2044, %v2047
      %v2049 = vsel %vm179, %v2040, %v2048
      %v2051 = vshrl.u32 %v1883, 16
      %v2053 = vrot.slane %v2051, 3
      %v2054 = vshll.u32 %v1883, 16
      %v2056 = vrot.slane %v2054, 4
      %v2057 = vor.u32 %v2053, %v2056
      %v2059 = vshrl.u32 %v1884, 16
      %v2061 = vrot.slane %v2059, 3
      %v2062 = vshll.u32 %v1884, 16
      %v2064 = vrot.slane %v2062, 4
      %v2065 = vor.u32 %v2061, %v2064
      %v2066 = vsel %vm179, %v2057, %v2065
      %v2068 = vshrl.u32 %v1885, 16
      %v2070 = vrot.slane %v2068, 3
      %v2071 = vshll.u32 %v1885, 16
      %v2073 = vrot.slane %v2071, 4
      %v2074 = vor.u32 %v2070, %v2073
      %v2076 = vshrl.u32 %v1886, 16
      %v2078 = vrot.slane %v2076, 3
      %v2079 = vshll.u32 %v1886, 16
      %v2081 = vrot.slane %v2079, 4
      %v2082 = vor.u32 %v2078, %v2081
      %v2083 = vsel %vm179, %v2074, %v2082
      %v2085 = vshrl.u32 %v1887, 16
      %v2087 = vrot.slane %v2085, 3
      %v2088 = vshll.u32 %v1887, 16
      %v2090 = vrot.slane %v2088, 4
      %v2091 = vor.u32 %v2087, %v2090
      %v2093 = vshrl.u32 %v1888, 16
      %v2095 = vrot.slane %v2093, 3
      %v2096 = vshll.u32 %v1888, 16
      %v2098 = vrot.slane %v2096, 4
      %v2099 = vor.u32 %v2095, %v2098
      %v2100 = vsel %vm179, %v2091, %v2099
      %v2102 = vshrl.u32 %v1889, 16
      %v2104 = vrot.slane %v2102, 3
      %v2105 = vshll.u32 %v1889, 16
      %v2107 = vrot.slane %v2105, 4
      %v2108 = vor.u32 %v2104, %v2107
      %v2110 = vshrl.u32 %v1890, 16
      %v2112 = vrot.slane %v2110, 3
      %v2113 = vshll.u32 %v1890, 16
      %v2115 = vrot.slane %v2113, 4
      %v2116 = vor.u32 %v2112, %v2115
      %v2117 = vsel %vm179, %v2108, %v2116
      %v2119 = vshrl.u32 %v1891, 16
      %v2121 = vrot.slane %v2119, 3
      %v2122 = vshll.u32 %v1891, 16
      %v2124 = vrot.slane %v2122, 4
      %v2125 = vor.u32 %v2121, %v2124
      %v2127 = vshrl.u32 %v1892, 16
      %v2129 = vrot.slane %v2127, 3
      %v2130 = vshll.u32 %v1892, 16
      %v2132 = vrot.slane %v2130, 4
      %v2133 = vor.u32 %v2129, %v2132
      %v2134 = vsel %vm179, %v2125, %v2133
      %v2136 = vshrl.u32 %v1893, 16
      %v2138 = vrot.slane %v2136, 3
      %v2139 = vshll.u32 %v1893, 16
      %v2141 = vrot.slane %v2139, 4
      %v2142 = vor.u32 %v2138, %v2141
      %v2144 = vshrl.u32 %v1894, 16
      %v2146 = vrot.slane %v2144, 3
      %v2147 = vshll.u32 %v1894, 16
      %v2149 = vrot.slane %v2147, 4
      %v2150 = vor.u32 %v2146, %v2149
      %v2151 = vsel %vm179, %v2142, %v2150
      %v2153 = vshrl.u32 %v1895, 16
      %v2155 = vrot.slane %v2153, 3
      %v2156 = vshll.u32 %v1895, 16
      %v2158 = vrot.slane %v2156, 4
      %v2159 = vor.u32 %v2155, %v2158
      %v2161 = vshrl.u32 %v1896, 16
      %v2163 = vrot.slane %v2161, 3
      %v2164 = vshll.u32 %v1896, 16
      %v2166 = vrot.slane %v2164, 4
      %v2167 = vor.u32 %v2163, %v2166
      %v2168 = vsel %vm179, %v2159, %v2167
      %v2169 = vld [vmem:[%s1864] sm:$0xf0]
      %v2170 = vld [vmem:[%s1864 + $0x10] sm:$0xf0]
      %v2171 = vld [vmem:[%s1864 + $0x20] sm:$0xf0]
      %v2172 = vld [vmem:[%s1864 + $0x30] sm:$0xf0]
      %v2173 = vld [vmem:[%s1864 + $0x40] sm:$0xf0]
      %v2174 = vld [vmem:[%s1864 + $0x50] sm:$0xf0]
      %v2175 = vld [vmem:[%s1864 + $0x60] sm:$0xf0]
      %v2176 = vld [vmem:[%s1864 + $0x70] sm:$0xf0]
      %v2177 = vld [vmem:[%s1864 + $0x80] sm:$0xf0]
      %v2178 = vld [vmem:[%s1864 + $0x90] sm:$0xf0]
      %v2179 = vld [vmem:[%s1864 + $0xa0] sm:$0xf0]
      %v2180 = vld [vmem:[%s1864 + $0xb0] sm:$0xf0]
      %v2181 = vld [vmem:[%s1864 + $0xc0] sm:$0xf0]
      %v2182 = vld [vmem:[%s1864 + $0xd0] sm:$0xf0]
      %v2183 = vld [vmem:[%s1864 + $0xe0] sm:$0xf0]
      %v2184 = vld [vmem:[%s1864 + $0xf0] sm:$0xf0]
      %v2217 = vrot.slane %v2169, 4
      %v2218 = vrot.slane %v1866, 4
      %v2219 = vsel %vm838, %v2217, %v2218
      %v2220 = vrot.slane %v2170, 4
      %v2221 = vrot.slane %v1868, 4
      %v2222 = vsel %vm838, %v2220, %v2221
      %v2223 = vrot.slane %v2171, 4
      %v2224 = vrot.slane %v1870, 4
      %v2225 = vsel %vm838, %v2223, %v2224
      %v2226 = vrot.slane %v2172, 4
      %v2227 = vrot.slane %v1872, 4
      %v2228 = vsel %vm838, %v2226, %v2227
      %v2229 = vrot.slane %v2173, 4
      %v2230 = vrot.slane %v1874, 4
      %v2231 = vsel %vm838, %v2229, %v2230
      %v2232 = vrot.slane %v2174, 4
      %v2233 = vrot.slane %v1876, 4
      %v2234 = vsel %vm838, %v2232, %v2233
      %v2235 = vrot.slane %v2175, 4
      %v2236 = vrot.slane %v1878, 4
      %v2237 = vsel %vm838, %v2235, %v2236
      %v2238 = vrot.slane %v2176, 4
      %v2239 = vrot.slane %v1880, 4
      %v2240 = vsel %vm838, %v2238, %v2239
      %v2241 = vrot.slane %v2177, 4
      %v2242 = vrot.slane %v1882, 4
      %v2243 = vsel %vm838, %v2241, %v2242
      %v2244 = vrot.slane %v2178, 4
      %v2245 = vrot.slane %v1884, 4
      %v2246 = vsel %vm838, %v2244, %v2245
      %v2247 = vrot.slane %v2179, 4
      %v2248 = vrot.slane %v1886, 4
      %v2249 = vsel %vm838, %v2247, %v2248
      %v2250 = vrot.slane %v2180, 4
      %v2251 = vrot.slane %v1888, 4
      %v2252 = vsel %vm838, %v2250, %v2251
      %v2253 = vrot.slane %v2181, 4
      %v2254 = vrot.slane %v1890, 4
      %v2255 = vsel %vm838, %v2253, %v2254
      %v2256 = vrot.slane %v2182, 4
      %v2257 = vrot.slane %v1892, 4
      %v2258 = vsel %vm838, %v2256, %v2257
      %v2259 = vrot.slane %v2183, 4
      %v2260 = vrot.slane %v1894, 4
      %v2261 = vsel %vm838, %v2259, %v2260
      %v2262 = vrot.slane %v2184, 4
      %v2263 = vrot.slane %v1896, 4
      %v2264 = vsel %vm838, %v2262, %v2263
      %v2265 = vld [vmem:[%s1864 + $0x8] sm:$0x1f]
      %v2266 = vld [vmem:[%s1864 + $0x18] sm:$0x1f]
      %v2267 = vld [vmem:[%s1864 + $0x28] sm:$0x1f]
      %v2268 = vld [vmem:[%s1864 + $0x38] sm:$0x1f]
      %v2269 = vld [vmem:[%s1864 + $0x48] sm:$0x1f]
      %v2270 = vld [vmem:[%s1864 + $0x58] sm:$0x1f]
      %v2271 = vld [vmem:[%s1864 + $0x68] sm:$0x1f]
      %v2272 = vld [vmem:[%s1864 + $0x78] sm:$0x1f]
      %v2273 = vld [vmem:[%s1864 + $0x88] sm:$0x1f]
      %v2274 = vld [vmem:[%s1864 + $0x98] sm:$0x1f]
      %v2275 = vld [vmem:[%s1864 + $0xa8] sm:$0x1f]
      %v2276 = vld [vmem:[%s1864 + $0xb8] sm:$0x1f]
      %v2277 = vld [vmem:[%s1864 + $0xc8] sm:$0x1f]
      %v2278 = vld [vmem:[%s1864 + $0xd8] sm:$0x1f]
      %v2279 = vld [vmem:[%s1864 + $0xe8] sm:$0x1f]
      %v2280 = vld [vmem:[%s1864 + $0xf8] sm:$0x1f]
      %v2282 = vshrl.u32 %v2169, 16
      %v2284 = vrot.slane %v2282, 4
      %v2285 = vshll.u32 %v2169, 16
      %v2287 = vrot.slane %v2285, 5
      %v2288 = vor.u32 %v2284, %v2287
      %v2290 = vshrl.u32 %v2265, 16
      %v2292 = vrot.slane %v2290, 4
      %v2293 = vshll.u32 %v2265, 16
      %v2295 = vrot.slane %v2293, 5
      %v2296 = vor.u32 %v2292, %v2295
      %v2297 = vsel %vm903, %v2288, %v2296
      %v2299 = vshrl.u32 %v2170, 16
      %v2301 = vrot.slane %v2299, 4
      %v2302 = vshll.u32 %v2170, 16
      %v2304 = vrot.slane %v2302, 5
      %v2305 = vor.u32 %v2301, %v2304
      %v2307 = vshrl.u32 %v2266, 16
      %v2309 = vrot.slane %v2307, 4
      %v2310 = vshll.u32 %v2266, 16
      %v2312 = vrot.slane %v2310, 5
      %v2313 = vor.u32 %v2309, %v2312
      %v2314 = vsel %vm903, %v2305, %v2313
      %v2316 = vshrl.u32 %v2171, 16
      %v2318 = vrot.slane %v2316, 4
      %v2319 = vshll.u32 %v2171, 16
      %v2321 = vrot.slane %v2319, 5
      %v2322 = vor.u32 %v2318, %v2321
      %v2324 = vshrl.u32 %v2267, 16
      %v2326 = vrot.slane %v2324, 4
      %v2327 = vshll.u32 %v2267, 16
      %v2329 = vrot.slane %v2327, 5
      %v2330 = vor.u32 %v2326, %v2329
      %v2331 = vsel %vm903, %v2322, %v2330
      %v2333 = vshrl.u32 %v2172, 16
      %v2335 = vrot.slane %v2333, 4
      %v2336 = vshll.u32 %v2172, 16
      %v2338 = vrot.slane %v2336, 5
      %v2339 = vor.u32 %v2335, %v2338
      %v2341 = vshrl.u32 %v2268, 16
      %v2343 = vrot.slane %v2341, 4
      %v2344 = vshll.u32 %v2268, 16
      %v2346 = vrot.slane %v2344, 5
      %v2347 = vor.u32 %v2343, %v2346
      %v2348 = vsel %vm903, %v2339, %v2347
      %v2350 = vshrl.u32 %v2173, 16
      %v2352 = vrot.slane %v2350, 4
      %v2353 = vshll.u32 %v2173, 16
      %v2355 = vrot.slane %v2353, 5
      %v2356 = vor.u32 %v2352, %v2355
      %v2358 = vshrl.u32 %v2269, 16
      %v2360 = vrot.slane %v2358, 4
      %v2361 = vshll.u32 %v2269, 16
      %v2363 = vrot.slane %v2361, 5
      %v2364 = vor.u32 %v2360, %v2363
      %v2365 = vsel %vm903, %v2356, %v2364
      %v2367 = vshrl.u32 %v2174, 16
      %v2369 = vrot.slane %v2367, 4
      %v2370 = vshll.u32 %v2174, 16
      %v2372 = vrot.slane %v2370, 5
      %v2373 = vor.u32 %v2369, %v2372
      %v2375 = vshrl.u32 %v2270, 16
      %v2377 = vrot.slane %v2375, 4
      %v2378 = vshll.u32 %v2270, 16
      %v2380 = vrot.slane %v2378, 5
      %v2381 = vor.u32 %v2377, %v2380
      %v2382 = vsel %vm903, %v2373, %v2381
      %v2384 = vshrl.u32 %v2175, 16
      %v2386 = vrot.slane %v2384, 4
      %v2387 = vshll.u32 %v2175, 16
      %v2389 = vrot.slane %v2387, 5
      %v2390 = vor.u32 %v2386, %v2389
      %v2392 = vshrl.u32 %v2271, 16
      %v2394 = vrot.slane %v2392, 4
      %v2395 = vshll.u32 %v2271, 16
      %v2397 = vrot.slane %v2395, 5
      %v2398 = vor.u32 %v2394, %v2397
      %v2399 = vsel %vm903, %v2390, %v2398
      %v2401 = vshrl.u32 %v2176, 16
      %v2403 = vrot.slane %v2401, 4
      %v2404 = vshll.u32 %v2176, 16
      %v2406 = vrot.slane %v2404, 5
      %v2407 = vor.u32 %v2403, %v2406
      %v2409 = vshrl.u32 %v2272, 16
      %v2411 = vrot.slane %v2409, 4
      %v2412 = vshll.u32 %v2272, 16
      %v2414 = vrot.slane %v2412, 5
      %v2415 = vor.u32 %v2411, %v2414
      %v2416 = vsel %vm903, %v2407, %v2415
      %v2418 = vshrl.u32 %v2177, 16
      %v2420 = vrot.slane %v2418, 4
      %v2421 = vshll.u32 %v2177, 16
      %v2423 = vrot.slane %v2421, 5
      %v2424 = vor.u32 %v2420, %v2423
      %v2426 = vshrl.u32 %v2273, 16
      %v2428 = vrot.slane %v2426, 4
      %v2429 = vshll.u32 %v2273, 16
      %v2431 = vrot.slane %v2429, 5
      %v2432 = vor.u32 %v2428, %v2431
      %v2433 = vsel %vm903, %v2424, %v2432
      %v2435 = vshrl.u32 %v2178, 16
      %v2437 = vrot.slane %v2435, 4
      %v2438 = vshll.u32 %v2178, 16
      %v2440 = vrot.slane %v2438, 5
      %v2441 = vor.u32 %v2437, %v2440
      %v2443 = vshrl.u32 %v2274, 16
      %v2445 = vrot.slane %v2443, 4
      %v2446 = vshll.u32 %v2274, 16
      %v2448 = vrot.slane %v2446, 5
      %v2449 = vor.u32 %v2445, %v2448
      %v2450 = vsel %vm903, %v2441, %v2449
      %v2452 = vshrl.u32 %v2179, 16
      %v2454 = vrot.slane %v2452, 4
      %v2455 = vshll.u32 %v2179, 16
      %v2457 = vrot.slane %v2455, 5
      %v2458 = vor.u32 %v2454, %v2457
      %v2460 = vshrl.u32 %v2275, 16
      %v2462 = vrot.slane %v2460, 4
      %v2463 = vshll.u32 %v2275, 16
      %v2465 = vrot.slane %v2463, 5
      %v2466 = vor.u32 %v2462, %v2465
      %v2467 = vsel %vm903, %v2458, %v2466
      %v2469 = vshrl.u32 %v2180, 16
      %v2471 = vrot.slane %v2469, 4
      %v2472 = vshll.u32 %v2180, 16
      %v2474 = vrot.slane %v2472, 5
      %v2475 = vor.u32 %v2471, %v2474
      %v2477 = vshrl.u32 %v2276, 16
      %v2479 = vrot.slane %v2477, 4
      %v2480 = vshll.u32 %v2276, 16
      %v2482 = vrot.slane %v2480, 5
      %v2483 = vor.u32 %v2479, %v2482
      %v2484 = vsel %vm903, %v2475, %v2483
      %v2486 = vshrl.u32 %v2181, 16
      %v2488 = vrot.slane %v2486, 4
      %v2489 = vshll.u32 %v2181, 16
      %v2491 = vrot.slane %v2489, 5
      %v2492 = vor.u32 %v2488, %v2491
      %v2494 = vshrl.u32 %v2277, 16
      %v2496 = vrot.slane %v2494, 4
      %v2497 = vshll.u32 %v2277, 16
      %v2499 = vrot.slane %v2497, 5
      %v2500 = vor.u32 %v2496, %v2499
      %v2501 = vsel %vm903, %v2492, %v2500
      %v2503 = vshrl.u32 %v2182, 16
      %v2505 = vrot.slane %v2503, 4
      %v2506 = vshll.u32 %v2182, 16
      %v2508 = vrot.slane %v2506, 5
      %v2509 = vor.u32 %v2505, %v2508
      %v2511 = vshrl.u32 %v2278, 16
      %v2513 = vrot.slane %v2511, 4
      %v2514 = vshll.u32 %v2278, 16
      %v2516 = vrot.slane %v2514, 5
      %v2517 = vor.u32 %v2513, %v2516
      %v2518 = vsel %vm903, %v2509, %v2517
      %v2520 = vshrl.u32 %v2183, 16
      %v2522 = vrot.slane %v2520, 4
      %v2523 = vshll.u32 %v2183, 16
      %v2525 = vrot.slane %v2523, 5
      %v2526 = vor.u32 %v2522, %v2525
      %v2528 = vshrl.u32 %v2279, 16
      %v2530 = vrot.slane %v2528, 4
      %v2531 = vshll.u32 %v2279, 16
      %v2533 = vrot.slane %v2531, 5
      %v2534 = vor.u32 %v2530, %v2533
      %v2535 = vsel %vm903, %v2526, %v2534
      %v2537 = vshrl.u32 %v2184, 16
      %v2539 = vrot.slane %v2537, 4
      %v2540 = vshll.u32 %v2184, 16
      %v2542 = vrot.slane %v2540, 5
      %v2543 = vor.u32 %v2539, %v2542
      %v2545 = vshrl.u32 %v2280, 16
      %v2547 = vrot.slane %v2545, 4
      %v2548 = vshll.u32 %v2280, 16
      %v2550 = vrot.slane %v2548, 5
      %v2551 = vor.u32 %v2547, %v2550
      %v2552 = vsel %vm903, %v2543, %v2551
      %2553 = vrot.lane.b32.xlu0 %v841, 8
      %v2554 = vpop.permute.xlu0 %2553
      %2555 = vrot.lane.b32.xlu0 %v844, 8
      %v2556 = vpop.permute.xlu0 %2555
      %2557 = vrot.lane.b32.xlu0 %v847, 8
      %v2558 = vpop.permute.xlu0 %2557
      %2559 = vrot.lane.b32.xlu0 %v850, 8
      %v2560 = vpop.permute.xlu0 %2559
      %2561 = vrot.lane.b32.xlu0 %v853, 8
      %v2562 = vpop.permute.xlu0 %2561
      %2563 = vrot.lane.b32.xlu0 %v856, 8
      %v2564 = vpop.permute.xlu0 %2563
      %2565 = vrot.lane.b32.xlu0 %v859, 8
      %v2566 = vpop.permute.xlu0 %2565
      %2567 = vrot.lane.b32.xlu0 %v862, 8
      %v2568 = vpop.permute.xlu0 %2567
      %2569 = vrot.lane.b32.xlu0 %v865, 8
      %v2570 = vpop.permute.xlu0 %2569
      %2571 = vrot.lane.b32.xlu0 %v868, 8
      %v2572 = vpop.permute.xlu0 %2571
      %2573 = vrot.lane.b32.xlu0 %v871, 8
      %v2574 = vpop.permute.xlu0 %2573
      %2575 = vrot.lane.b32.xlu0 %v874, 8
      %v2576 = vpop.permute.xlu0 %2575
      %2577 = vrot.lane.b32.xlu0 %v877, 8
      %v2578 = vpop.permute.xlu0 %2577
      %2579 = vrot.lane.b32.xlu0 %v880, 8
      %v2580 = vpop.permute.xlu0 %2579
      %2581 = vrot.lane.b32.xlu0 %v883, 8
      %v2582 = vpop.permute.xlu0 %2581
      %2583 = vrot.lane.b32.xlu0 %v886, 8
      %v2584 = vpop.permute.xlu0 %2583
      %2585 = vrot.lane.b32.xlu0 %v920, 16
      %v2586 = vpop.permute.xlu0 %2585
      %2587 = vrot.lane.b32.xlu0 %v937, 16
      %v2588 = vpop.permute.xlu0 %2587
      %2589 = vrot.lane.b32.xlu0 %v954, 16
      %v2590 = vpop.permute.xlu0 %2589
      %2591 = vrot.lane.b32.xlu0 %v971, 16
      %v2592 = vpop.permute.xlu0 %2591
      %2593 = vrot.lane.b32.xlu0 %v988, 16
      %v2594 = vpop.permute.xlu0 %2593
      %2595 = vrot.lane.b32.xlu0 %v1005, 16
      %v2596 = vpop.permute.xlu0 %2595
      %2597 = vrot.lane.b32.xlu0 %v1022, 16
      %v2598 = vpop.permute.xlu0 %2597
      %2599 = vrot.lane.b32.xlu0 %v1039, 16
      %v2600 = vpop.permute.xlu0 %2599
      %2601 = vrot.lane.b32.xlu0 %v1056, 16
      %v2602 = vpop.permute.xlu0 %2601
      %2603 = vrot.lane.b32.xlu0 %v1073, 16
      %v2604 = vpop.permute.xlu0 %2603
      %2605 = vrot.lane.b32.xlu0 %v1090, 16
      %v2606 = vpop.permute.xlu0 %2605
      %2607 = vrot.lane.b32.xlu0 %v1107, 16
      %v2608 = vpop.permute.xlu0 %2607
      %2609 = vrot.lane.b32.xlu0 %v1124, 16
      %v2610 = vpop.permute.xlu0 %2609
      %2611 = vrot.lane.b32.xlu0 %v1141, 16
      %v2612 = vpop.permute.xlu0 %2611
      %2613 = vrot.lane.b32.xlu0 %v1158, 16
      %v2614 = vpop.permute.xlu0 %2613
      %2615 = vrot.lane.b32.xlu0 %v1175, 16
      %v2616 = vpop.permute.xlu0 %2615
      %2617 = vrot.lane.b32.xlu0 %v1224, 24
      %v2618 = vpop.permute.xlu0 %2617
      %2619 = vrot.lane.b32.xlu0 %v1241, 24
      %v2620 = vpop.permute.xlu0 %2619
      %2621 = vrot.lane.b32.xlu0 %v1258, 24
      %v2622 = vpop.permute.xlu0 %2621
      %2623 = vrot.lane.b32.xlu0 %v1275, 24
      %v2624 = vpop.permute.xlu0 %2623
      %2625 = vrot.lane.b32.xlu0 %v1292, 24
      %v2626 = vpop.permute.xlu0 %2625
      %2627 = vrot.lane.b32.xlu0 %v1309, 24
      %v2628 = vpop.permute.xlu0 %2627
      %2629 = vrot.lane.b32.xlu0 %v1326, 24
      %v2630 = vpop.permute.xlu0 %2629
      %2631 = vrot.lane.b32.xlu0 %v1343, 24
      %v2632 = vpop.permute.xlu0 %2631
      %2633 = vrot.lane.b32.xlu0 %v1360, 24
      %v2634 = vpop.permute.xlu0 %2633
      %2635 = vrot.lane.b32.xlu0 %v1377, 24
      %v2636 = vpop.permute.xlu0 %2635
      %2637 = vrot.lane.b32.xlu0 %v1394, 24
      %v2638 = vpop.permute.xlu0 %2637
      %2639 = vrot.lane.b32.xlu0 %v1411, 24
      %v2640 = vpop.permute.xlu0 %2639
      %2641 = vrot.lane.b32.xlu0 %v1428, 24
      %v2642 = vpop.permute.xlu0 %2641
      %2643 = vrot.lane.b32.xlu0 %v1445, 24
      %v2644 = vpop.permute.xlu0 %2643
      %2645 = vrot.lane.b32.xlu0 %v1462, 24
      %v2646 = vpop.permute.xlu0 %2645
      %2647 = vrot.lane.b32.xlu0 %v1479, 24
      %v2648 = vpop.permute.xlu0 %2647
      %2649 = vrot.lane.b32.xlu0 %v1530, 32
      %v2650 = vpop.permute.xlu0 %2649
      %2651 = vrot.lane.b32.xlu0 %v1533, 32
      %v2652 = vpop.permute.xlu0 %2651
      %2653 = vrot.lane.b32.xlu0 %v1536, 32
      %v2654 = vpop.permute.xlu0 %2653
      %2655 = vrot.lane.b32.xlu0 %v1539, 32
      %v2656 = vpop.permute.xlu0 %2655
      %2657 = vrot.lane.b32.xlu0 %v1542, 32
      %v2658 = vpop.permute.xlu0 %2657
      %2659 = vrot.lane.b32.xlu0 %v1545, 32
      %v2660 = vpop.permute.xlu0 %2659
      %2661 = vrot.lane.b32.xlu0 %v1548, 32
      %v2662 = vpop.permute.xlu0 %2661
      %2663 = vrot.lane.b32.xlu0 %v1551, 32
      %v2664 = vpop.permute.xlu0 %2663
      %2665 = vrot.lane.b32.xlu0 %v1554, 32
      %v2666 = vpop.permute.xlu0 %2665
      %2667 = vrot.lane.b32.xlu0 %v1557, 32
      %v2668 = vpop.permute.xlu0 %2667
      %2669 = vrot.lane.b32.xlu0 %v1560, 32
      %v2670 = vpop.permute.xlu0 %2669
      %2671 = vrot.lane.b32.xlu0 %v1563, 32
      %v2672 = vpop.permute.xlu0 %2671
      %2673 = vrot.lane.b32.xlu0 %v1566, 32
      %v2674 = vpop.permute.xlu0 %2673
      %2675 = vrot.lane.b32.xlu0 %v1569, 32
      %v2676 = vpop.permute.xlu0 %2675
      %2677 = vrot.lane.b32.xlu0 %v1572, 32
      %v2678 = vpop.permute.xlu0 %2677
      %2679 = vrot.lane.b32.xlu0 %v1575, 32
      %v2680 = vpop.permute.xlu0 %2679
      %2681 = vrot.lane.b32.xlu0 %v1608, 40
      %v2682 = vpop.permute.xlu0 %2681
      %2683 = vrot.lane.b32.xlu0 %v1625, 40
      %v2684 = vpop.permute.xlu0 %2683
      %2685 = vrot.lane.b32.xlu0 %v1642, 40
      %v2686 = vpop.permute.xlu0 %2685
      %2687 = vrot.lane.b32.xlu0 %v1659, 40
      %v2688 = vpop.permute.xlu0 %2687
      %2689 = vrot.lane.b32.xlu0 %v1676, 40
      %v2690 = vpop.permute.xlu0 %2689
      %2691 = vrot.lane.b32.xlu0 %v1693, 40
      %v2692 = vpop.permute.xlu0 %2691
      %2693 = vrot.lane.b32.xlu0 %v1710, 40
      %v2694 = vpop.permute.xlu0 %2693
      %2695 = vrot.lane.b32.xlu0 %v1727, 40
      %v2696 = vpop.permute.xlu0 %2695
      %2697 = vrot.lane.b32.xlu0 %v1744, 40
      %v2698 = vpop.permute.xlu0 %2697
      %2699 = vrot.lane.b32.xlu0 %v1761, 40
      %v2700 = vpop.permute.xlu0 %2699
      %2701 = vrot.lane.b32.xlu0 %v1778, 40
      %v2702 = vpop.permute.xlu0 %2701
      %2703 = vrot.lane.b32.xlu0 %v1795, 40
      %v2704 = vpop.permute.xlu0 %2703
      %2705 = vrot.lane.b32.xlu0 %v1812, 40
      %v2706 = vpop.permute.xlu0 %2705
      %2707 = vrot.lane.b32.xlu0 %v1829, 40
      %v2708 = vpop.permute.xlu0 %2707
      %2709 = vrot.lane.b32.xlu0 %v1846, 40
      %v2710 = vpop.permute.xlu0 %2709
      %2711 = vrot.lane.b32.xlu0 %v1863, 40
      %v2712 = vpop.permute.xlu0 %2711
      %2713 = vrot.lane.b32.xlu0 %v1913, 48
      %v2714 = vpop.permute.xlu0 %2713
      %2715 = vrot.lane.b32.xlu0 %v1930, 48
      %v2716 = vpop.permute.xlu0 %2715
      %2717 = vrot.lane.b32.xlu0 %v1947, 48
      %v2718 = vpop.permute.xlu0 %2717
      %2719 = vrot.lane.b32.xlu0 %v1964, 48
      %v2720 = vpop.permute.xlu0 %2719
      %2721 = vrot.lane.b32.xlu0 %v1981, 48
      %v2722 = vpop.permute.xlu0 %2721
      %2723 = vrot.lane.b32.xlu0 %v1998, 48
      %v2724 = vpop.permute.xlu0 %2723
      %2725 = vrot.lane.b32.xlu0 %v2015, 48
      %v2726 = vpop.permute.xlu0 %2725
      %2727 = vrot.lane.b32.xlu0 %v2032, 48
      %v2728 = vpop.permute.xlu0 %2727
      %2729 = vrot.lane.b32.xlu0 %v2049, 48
      %v2730 = vpop.permute.xlu0 %2729
      %2731 = vrot.lane.b32.xlu0 %v2066, 48
      %v2732 = vpop.permute.xlu0 %2731
      %2733 = vrot.lane.b32.xlu0 %v2083, 48
      %v2734 = vpop.permute.xlu0 %2733
      %2735 = vrot.lane.b32.xlu0 %v2100, 48
      %v2736 = vpop.permute.xlu0 %2735
      %2737 = vrot.lane.b32.xlu0 %v2117, 48
      %v2738 = vpop.permute.xlu0 %2737
      %2739 = vrot.lane.b32.xlu0 %v2134, 48
      %v2740 = vpop.permute.xlu0 %2739
      %2741 = vrot.lane.b32.xlu0 %v2151, 48
      %v2742 = vpop.permute.xlu0 %2741
      %2743 = vrot.lane.b32.xlu0 %v2168, 48
      %v2744 = vpop.permute.xlu0 %2743
      %2745 = vrot.lane.b32.xlu0 %v2219, 56
      %v2746 = vpop.permute.xlu0 %2745
      %2747 = vrot.lane.b32.xlu0 %v2222, 56
      %v2748 = vpop.permute.xlu0 %2747
      %2749 = vrot.lane.b32.xlu0 %v2225, 56
      %v2750 = vpop.permute.xlu0 %2749
      %2751 = vrot.lane.b32.xlu0 %v2228, 56
      %v2752 = vpop.permute.xlu0 %2751
      %2753 = vrot.lane.b32.xlu0 %v2231, 56
      %v2754 = vpop.permute.xlu0 %2753
      %2755 = vrot.lane.b32.xlu0 %v2234, 56
      %v2756 = vpop.permute.xlu0 %2755
      %2757 = vrot.lane.b32.xlu0 %v2237, 56
      %v2758 = vpop.permute.xlu0 %2757
      %2759 = vrot.lane.b32.xlu0 %v2240, 56
      %v2760 = vpop.permute.xlu0 %2759
      %2761 = vrot.lane.b32.xlu0 %v2243, 56
      %v2762 = vpop.permute.xlu0 %2761
      %2763 = vrot.lane.b32.xlu0 %v2246, 56
      %v2764 = vpop.permute.xlu0 %2763
      %2765 = vrot.lane.b32.xlu0 %v2249, 56
      %v2766 = vpop.permute.xlu0 %2765
      %2767 = vrot.lane.b32.xlu0 %v2252, 56
      %v2768 = vpop.permute.xlu0 %2767
      %2769 = vrot.lane.b32.xlu0 %v2255, 56
      %v2770 = vpop.permute.xlu0 %2769
      %2771 = vrot.lane.b32.xlu0 %v2258, 56
      %v2772 = vpop.permute.xlu0 %2771
      %2773 = vrot.lane.b32.xlu0 %v2261, 56
      %v2774 = vpop.permute.xlu0 %2773
      %2775 = vrot.lane.b32.xlu0 %v2264, 56
      %v2776 = vpop.permute.xlu0 %2775
      %2777 = vrot.lane.b32.xlu0 %v2297, 64
      %v2778 = vpop.permute.xlu0 %2777
      %2779 = vrot.lane.b32.xlu0 %v2314, 64
      %v2780 = vpop.permute.xlu0 %2779
      %2781 = vrot.lane.b32.xlu0 %v2331, 64
      %v2782 = vpop.permute.xlu0 %2781
      %2783 = vrot.lane.b32.xlu0 %v2348, 64
      %v2784 = vpop.permute.xlu0 %2783
      %2785 = vrot.lane.b32.xlu0 %v2365, 64
      %v2786 = vpop.permute.xlu0 %2785
      %2787 = vrot.lane.b32.xlu0 %v2382, 64
      %v2788 = vpop.permute.xlu0 %2787
      %2789 = vrot.lane.b32.xlu0 %v2399, 64
      %v2790 = vpop.permute.xlu0 %2789
      %2791 = vrot.lane.b32.xlu0 %v2416, 64
      %v2792 = vpop.permute.xlu0 %2791
      %2793 = vrot.lane.b32.xlu0 %v2433, 64
      %v2794 = vpop.permute.xlu0 %2793
      %2795 = vrot.lane.b32.xlu0 %v2450, 64
      %v2796 = vpop.permute.xlu0 %2795
      %2797 = vrot.lane.b32.xlu0 %v2467, 64
      %v2798 = vpop.permute.xlu0 %2797
      %2799 = vrot.lane.b32.xlu0 %v2484, 64
      %v2800 = vpop.permute.xlu0 %2799
      %2801 = vrot.lane.b32.xlu0 %v2501, 64
      %v2802 = vpop.permute.xlu0 %2801
      %2803 = vrot.lane.b32.xlu0 %v2518, 64
      %v2804 = vpop.permute.xlu0 %2803
      %2805 = vrot.lane.b32.xlu0 %v2535, 64
      %v2806 = vpop.permute.xlu0 %2805
      %2807 = vrot.lane.b32.xlu0 %v2552, 64
      %v2808 = vpop.permute.xlu0 %2807
      %vm2809 = vcmask 64512
      %v2812 = vsel %vm2809, %v534, %v2554
      %v2815 = vsel %vm2809, %v551, %v2556
      %v2818 = vsel %vm2809, %v568, %v2558
      %v2821 = vsel %vm2809, %v585, %v2560
      %v2824 = vsel %vm2809, %v602, %v2562
      %v2827 = vsel %vm2809, %v619, %v2564
      %v2830 = vsel %vm2809, %v636, %v2566
      %v2833 = vsel %vm2809, %v653, %v2568
      %v2836 = vsel %vm2809, %v670, %v2570
      %v2839 = vsel %vm2809, %v687, %v2572
      %v2842 = vsel %vm2809, %v704, %v2574
      %v2845 = vsel %vm2809, %v721, %v2576
      %v2848 = vsel %vm2809, %v738, %v2578
      %v2851 = vsel %vm2809, %v755, %v2580
      %v2854 = vsel %vm2809, %v772, %v2582
      %v2857 = vsel %vm2809, %v789, %v2584
      %vm2858 = vcmask 130048
      %v2860 = vsel %vm2858, %v2812, %v2586
      %v2862 = vsel %vm2858, %v2815, %v2588
      %v2864 = vsel %vm2858, %v2818, %v2590
      %v2866 = vsel %vm2858, %v2821, %v2592
      %v2868 = vsel %vm2858, %v2824, %v2594
      %v2870 = vsel %vm2858, %v2827, %v2596
      %v2872 = vsel %vm2858, %v2830, %v2598
      %v2874 = vsel %vm2858, %v2833, %v2600
      %v2876 = vsel %vm2858, %v2836, %v2602
      %v2878 = vsel %vm2858, %v2839, %v2604
      %v2880 = vsel %vm2858, %v2842, %v2606
      %v2882 = vsel %vm2858, %v2845, %v2608
      %v2884 = vsel %vm2858, %v2848, %v2610
      %v2886 = vsel %vm2858, %v2851, %v2612
      %v2888 = vsel %vm2858, %v2854, %v2614
      %v2890 = vsel %vm2858, %v2857, %v2616
      %vm2891 = vcmask 195584
      %v2893 = vsel %vm2891, %v2860, %v2618
      %v2895 = vsel %vm2891, %v2862, %v2620
      %v2897 = vsel %vm2891, %v2864, %v2622
      %v2899 = vsel %vm2891, %v2866, %v2624
      %v2901 = vsel %vm2891, %v2868, %v2626
      %v2903 = vsel %vm2891, %v2870, %v2628
      %v2905 = vsel %vm2891, %v2872, %v2630
      %v2907 = vsel %vm2891, %v2874, %v2632
      %v2909 = vsel %vm2891, %v2876, %v2634
      %v2911 = vsel %vm2891, %v2878, %v2636
      %v2913 = vsel %vm2891, %v2880, %v2638
      %v2915 = vsel %vm2891, %v2882, %v2640
      %v2917 = vsel %vm2891, %v2884, %v2642
      %v2919 = vsel %vm2891, %v2886, %v2644
      %v2921 = vsel %vm2891, %v2888, %v2646
      %v2923 = vsel %vm2891, %v2890, %v2648
      %vm2924 = vcmask 261120
      %v2926 = vsel %vm2924, %v2893, %v2650
      %v2928 = vsel %vm2924, %v2895, %v2652
      %v2930 = vsel %vm2924, %v2897, %v2654
      %v2932 = vsel %vm2924, %v2899, %v2656
      %v2934 = vsel %vm2924, %v2901, %v2658
      %v2936 = vsel %vm2924, %v2903, %v2660
      %v2938 = vsel %vm2924, %v2905, %v2662
      %v2940 = vsel %vm2924, %v2907, %v2664
      %v2942 = vsel %vm2924, %v2909, %v2666
      %v2944 = vsel %vm2924, %v2911, %v2668
      %v2946 = vsel %vm2924, %v2913, %v2670
      %v2948 = vsel %vm2924, %v2915, %v2672
      %v2950 = vsel %vm2924, %v2917, %v2674
      %v2952 = vsel %vm2924, %v2919, %v2676
      %v2954 = vsel %vm2924, %v2921, %v2678
      %v2956 = vsel %vm2924, %v2923, %v2680
      %vm2957 = vcmask 326656
      %v2959 = vsel %vm2957, %v2926, %v2682
      %v2961 = vsel %vm2957, %v2928, %v2684
      %v2963 = vsel %vm2957, %v2930, %v2686
      %v2965 = vsel %vm2957, %v2932, %v2688
      %v2967 = vsel %vm2957, %v2934, %v2690
      %v2969 = vsel %vm2957, %v2936, %v2692
      %v2971 = vsel %vm2957, %v2938, %v2694
      %v2973 = vsel %vm2957, %v2940, %v2696
      %v2975 = vsel %vm2957, %v2942, %v2698
      %v2977 = vsel %vm2957, %v2944, %v2700
      %v2979 = vsel %vm2957, %v2946, %v2702
      %v2981 = vsel %vm2957, %v2948, %v2704
      %v2983 = vsel %vm2957, %v2950, %v2706
      %v2985 = vsel %vm2957, %v2952, %v2708
      %v2987 = vsel %vm2957, %v2954, %v2710
      %v2989 = vsel %vm2957, %v2956, %v2712
      %vm2990 = vcmask 392192
      %v2992 = vsel %vm2990, %v2959, %v2714
      %v2994 = vsel %vm2990, %v2961, %v2716
      %v2996 = vsel %vm2990, %v2963, %v2718
      %v2998 = vsel %vm2990, %v2965, %v2720
      %v3000 = vsel %vm2990, %v2967, %v2722
      %v3002 = vsel %vm2990, %v2969, %v2724
      %v3004 = vsel %vm2990, %v2971, %v2726
      %v3006 = vsel %vm2990, %v2973, %v2728
      %v3008 = vsel %vm2990, %v2975, %v2730
      %v3010 = vsel %vm2990, %v2977, %v2732
      %v3012 = vsel %vm2990, %v2979, %v2734
      %v3014 = vsel %vm2990, %v2981, %v2736
      %v3016 = vsel %vm2990, %v2983, %v2738
      %v3018 = vsel %vm2990, %v2985, %v2740
      %v3020 = vsel %vm2990, %v2987, %v2742
      %v3022 = vsel %vm2990, %v2989, %v2744
      %vm3023 = vcmask 457728
      %v3025 = vsel %vm3023, %v2992, %v2746
      %v3027 = vsel %vm3023, %v2994, %v2748
      %v3029 = vsel %vm3023, %v2996, %v2750
      %v3031 = vsel %vm3023, %v2998, %v2752
      %v3033 = vsel %vm3023, %v3000, %v2754
      %v3035 = vsel %vm3023, %v3002, %v2756
      %v3037 = vsel %vm3023, %v3004, %v2758
      %v3039 = vsel %vm3023, %v3006, %v2760
      %v3041 = vsel %vm3023, %v3008, %v2762
      %v3043 = vsel %vm3023, %v3010, %v2764
      %v3045 = vsel %vm3023, %v3012, %v2766
      %v3047 = vsel %vm3023, %v3014, %v2768
      %v3049 = vsel %vm3023, %v3016, %v2770
      %v3051 = vsel %vm3023, %v3018, %v2772
      %v3053 = vsel %vm3023, %v3020, %v2774
      %v3055 = vsel %vm3023, %v3022, %v2776
      %vm3056 = vcmask 523264
      %v3058 = vsel %vm3056, %v3025, %v2778
      %v3060 = vsel %vm3056, %v3027, %v2780
      %v3062 = vsel %vm3056, %v3029, %v2782
      %v3064 = vsel %vm3056, %v3031, %v2784
      %v3066 = vsel %vm3056, %v3033, %v2786
      %v3068 = vsel %vm3056, %v3035, %v2788
      %v3070 = vsel %vm3056, %v3037, %v2790
      %v3072 = vsel %vm3056, %v3039, %v2792
      %v3074 = vsel %vm3056, %v3041, %v2794
      %v3076 = vsel %vm3056, %v3043, %v2796
      %v3078 = vsel %vm3056, %v3045, %v2798
      %v3080 = vsel %vm3056, %v3047, %v2800
      %v3082 = vsel %vm3056, %v3049, %v2802
      %v3084 = vsel %vm3056, %v3051, %v2804
      %v3086 = vsel %vm3056, %v3053, %v2806
      %v3088 = vsel %vm3056, %v3055, %v2808
      %vm3089 = vcmask 588800
      %v3091 = vsel %vm3089, %v3058, 0
      %v3093 = vsel %vm3089, %v3060, 0
      %v3095 = vsel %vm3089, %v3062, 0
      %v3097 = vsel %vm3089, %v3064, 0
      %v3099 = vsel %vm3089, %v3066, 0
      %v3101 = vsel %vm3089, %v3068, 0
      %v3103 = vsel %vm3089, %v3070, 0
      %v3105 = vsel %vm3089, %v3072, 0
      %v3107 = vsel %vm3089, %v3074, 0
      %v3109 = vsel %vm3089, %v3076, 0
      %v3111 = vsel %vm3089, %v3078, 0
      %v3113 = vsel %vm3089, %v3080, 0
      %v3115 = vsel %vm3089, %v3082, 0
      %v3117 = vsel %vm3089, %v3084, 0
      %v3119 = vsel %vm3089, %v3086, 0
      %v3121 = vsel %vm3089, %v3088, 0
      %v3123 = vld [vmem:[%s1] sm:$0xf]
      %v3124 = vld [vmem:[%s1 + $0x4] sm:$0xf]
      %v3125 = vld [vmem:[%s1 + $0x8] sm:$0xf]
      %v3126 = vld [vmem:[%s1 + $0xc] sm:$0xf]
      %v3127 = vld [vmem:[%s1 + $0x10] sm:$0xf]
      %v3128 = vld [vmem:[%s1 + $0x14] sm:$0xf]
      %v3129 = vld [vmem:[%s1 + $0x18] sm:$0xf]
      %v3130 = vld [vmem:[%s1 + $0x1c] sm:$0xf]
      %v3131 = vld [vmem:[%s1 + $0x20] sm:$0xf]
      %v3132 = vld [vmem:[%s1 + $0x24] sm:$0xf]
      %v3133 = vld [vmem:[%s1 + $0x28] sm:$0xf]
      %v3134 = vld [vmem:[%s1 + $0x2c] sm:$0xf]
      %v3135 = vld [vmem:[%s1 + $0x30] sm:$0xf]
      %v3136 = vld [vmem:[%s1 + $0x34] sm:$0xf]
      %v3137 = vld [vmem:[%s1 + $0x38] sm:$0xf]
      %v3138 = vld [vmem:[%s1 + $0x3c] sm:$0xf]
      %v3139 = vld [vmem:[%s2] sm:$0x1]
      %v3141 = vlaneseq
      %v3142 = vshrl.u32 %v3141, 7
      %v3143 = vsub.s32 0, %v3142
      %v3144 = vrot.slane %v3139, %v3143
      %v3162 = vunpack.c.l.b16 %v3123
      %v3163 = vunpack.c.l.b16 %v3124
      %v3164 = vunpack.c.l.b16 %v3125
      %v3165 = vunpack.c.l.b16 %v3126
      %v3166 = vunpack.c.l.b16 %v3127
      %v3167 = vunpack.c.l.b16 %v3128
      %v3168 = vunpack.c.l.b16 %v3129
      %v3169 = vunpack.c.l.b16 %v3130
      %v3170 = vunpack.c.l.b16 %v3131
      %v3171 = vunpack.c.l.b16 %v3132
      %v3172 = vunpack.c.l.b16 %v3133
      %v3173 = vunpack.c.l.b16 %v3134
      %v3174 = vunpack.c.l.b16 %v3135
      %v3175 = vunpack.c.l.b16 %v3136
      %v3176 = vunpack.c.l.b16 %v3137
      %v3177 = vunpack.c.l.b16 %v3138
      %v3178 = vpack.c.b16 %v3163, %v3162
      %v3179 = vpack.c.b16 %v3165, %v3164
      %v3180 = vpack.c.b16 %v3167, %v3166
      %v3181 = vpack.c.b16 %v3169, %v3168
      %v3182 = vpack.c.b16 %v3171, %v3170
      %v3183 = vpack.c.b16 %v3173, %v3172
      %v3184 = vpack.c.b16 %v3175, %v3174
      %v3185 = vpack.c.b16 %v3177, %v3176
      %3194 = vmatprep.subr.bf16.mxu0 0
      %3195 = vmatpush1.bf16.msra.mxu0 %v3178
      %3196 = vmatprep.subr.bf16.mxu0 0
      %3197 = vmatpush1.bf16.msra.mxu0 %v3179
      %3198 = vmatprep.subr.bf16.mxu0 0
      %3199 = vmatpush1.bf16.msra.mxu0 %v3180
      %3200 = vmatprep.subr.bf16.mxu0 0
      %3201 = vmatpush1.bf16.msra.mxu0 %v3181
      %3202 = vmatprep.subr.bf16.mxu0 0
      %3203 = vmatpush1.bf16.msra.mxu0 %v3182
      %3204 = vmatprep.subr.bf16.mxu0 0
      %3205 = vmatpush1.bf16.msra.mxu0 %v3183
      %3206 = vmatprep.subr.bf16.mxu0 0
      %3207 = vmatpush1.bf16.msra.mxu0 %v3184
      %3208 = vmatprep.subr.bf16.mxu0 0
      %3209 = vmatpush1.bf16.msra.mxu0 %v3185
      %3210 = vmatprep.subr.bf16.mxu0 0
      %3211 = vmatpush1.bf16.msra.mxu0 0
      %3212 = vmatprep.subr.bf16.mxu0 0
      %3213 = vmatpush1.bf16.msra.mxu0 0
      %3214 = vmatprep.subr.bf16.mxu0 0
      %3215 = vmatpush1.bf16.msra.mxu0 0
      %3216 = vmatprep.subr.bf16.mxu0 0
      %3217 = vmatpush1.bf16.msra.mxu0 0
      %3218 = vmatprep.subr.bf16.mxu0 0
      %3219 = vmatpush1.bf16.msra.mxu0 0
      %3220 = vmatprep.subr.bf16.mxu0 0
      %3221 = vmatpush1.bf16.msra.mxu0 0
      %3222 = vmatprep.subr.bf16.mxu0 0
      %3223 = vmatpush1.bf16.msra.mxu0 0
      %3224 = vmatprep.subr.bf16.mxu0 0
      %3225 = vmatpush1.bf16.msra.mxu0 0
      %3226 = vmatprep.mubr.bf16.mxu0 0
      %3227 = vmatmul.mubr.bf16.gmra.mrb[0].mxu0 %v3091
      %v3228 = vpop.f32.mrb[0].mxu0
      %v3229 = vadd.f32 %v3144, %v3228
      %v3230 = vpop.f32.mrb[0].mxu0
      %v3231 = vpop.f32.mrb[0].mxu0
      %v3232 = vadd.f32 %v3144, %v3231
      %v3233 = vpop.f32.mrb[0].mxu0
      %3234 = vmatprep.mubr.bf16.mxu0 0
      %3235 = vmatmul.mubr.bf16.gmra.mrb[0].mxu0 %v3093
      %v3236 = vpop.f32.mrb[0].mxu0
      %v3237 = vadd.f32 %v3144, %v3236
      %v3238 = vpop.f32.mrb[0].mxu0
      %v3239 = vpop.f32.mrb[0].mxu0
      %v3240 = vadd.f32 %v3144, %v3239
      %v3241 = vpop.f32.mrb[0].mxu0
      %3242 = vmatprep.mubr.bf16.mxu0 0
      %3243 = vmatmul.mubr.bf16.gmra.mrb[0].mxu0 %v3095
      %v3244 = vpop.f32.mrb[0].mxu0
      %v3245 = vadd.f32 %v3144, %v3244
      %v3246 = vpop.f32.mrb[0].mxu0
      %v3247 = vpop.f32.mrb[0].mxu0
      %v3248 = vadd.f32 %v3144, %v3247
      %v3249 = vpop.f32.mrb[0].mxu0
      %3250 = vmatprep.mubr.bf16.mxu0 0
      %3251 = vmatmul.mubr.bf16.gmra.mrb[0].mxu0 %v3097
      %v3252 = vpop.f32.mrb[0].mxu0
      %v3253 = vadd.f32 %v3144, %v3252
      %v3254 = vpop.f32.mrb[0].mxu0
      %v3255 = vpop.f32.mrb[0].mxu0
      %v3256 = vadd.f32 %v3144, %v3255
      %v3257 = vpop.f32.mrb[0].mxu0
      %3258 = vmatprep.mubr.bf16.mxu0 0
      %3259 = vmatmul.mubr.bf16.gmra.mrb[0].mxu0 %v3099
      %v3260 = vpop.f32.mrb[0].mxu0
      %v3261 = vadd.f32 %v3144, %v3260
      %v3262 = vpop.f32.mrb[0].mxu0
      %v3263 = vpop.f32.mrb[0].mxu0
      %v3264 = vadd.f32 %v3144, %v3263
      %v3265 = vpop.f32.mrb[0].mxu0
      %3266 = vmatprep.mubr.bf16.mxu0 0
      %3267 = vmatmul.mubr.bf16.gmra.mrb[0].mxu0 %v3101
      %v3268 = vpop.f32.mrb[0].mxu0
      %v3269 = vadd.f32 %v3144, %v3268
      %v3270 = vpop.f32.mrb[0].mxu0
      %v3271 = vpop.f32.mrb[0].mxu0
      %v3272 = vadd.f32 %v3144, %v3271
      %v3273 = vpop.f32.mrb[0].mxu0
      %3274 = vmatprep.mubr.bf16.mxu0 0
      %3275 = vmatmul.mubr.bf16.gmra.mrb[0].mxu0 %v3103
      %v3276 = vpop.f32.mrb[0].mxu0
      %v3277 = vadd.f32 %v3144, %v3276
      %v3278 = vpop.f32.mrb[0].mxu0
      %v3279 = vpop.f32.mrb[0].mxu0
      %v3280 = vadd.f32 %v3144, %v3279
      %v3281 = vpop.f32.mrb[0].mxu0
      %3282 = vmatprep.mubr.bf16.mxu0 0
      %3283 = vmatmul.mubr.bf16.gmra.mrb[0].mxu0 %v3105
      %v3284 = vpop.f32.mrb[0].mxu0
      %v3285 = vadd.f32 %v3144, %v3284
      %v3286 = vpop.f32.mrb[0].mxu0
      %v3287 = vpop.f32.mrb[0].mxu0
      %v3288 = vadd.f32 %v3144, %v3287
      %v3289 = vpop.f32.mrb[0].mxu0
      %3290 = vmatprep.mubr.bf16.mxu0 0
      %3291 = vmatmul.mubr.bf16.gmra.mrb[0].mxu0 %v3107
      %v3292 = vpop.f32.mrb[0].mxu0
      %v3293 = vadd.f32 %v3144, %v3292
      %v3294 = vpop.f32.mrb[0].mxu0
      %v3295 = vpop.f32.mrb[0].mxu0
      %v3296 = vadd.f32 %v3144, %v3295
      %v3297 = vpop.f32.mrb[0].mxu0
      %3298 = vmatprep.mubr.bf16.mxu0 0
      %3299 = vmatmul.mubr.bf16.gmra.mrb[0].mxu0 %v3109
      %v3300 = vpop.f32.mrb[0].mxu0
      %v3301 = vadd.f32 %v3144, %v3300
      %v3302 = vpop.f32.mrb[0].mxu0
      %v3303 = vpop.f32.mrb[0].mxu0
      %v3304 = vadd.f32 %v3144, %v3303
      %v3305 = vpop.f32.mrb[0].mxu0
      %3306 = vmatprep.mubr.bf16.mxu0 0
      %3307 = vmatmul.mubr.bf16.gmra.mrb[0].mxu0 %v3111
      %v3308 = vpop.f32.mrb[0].mxu0
      %v3309 = vadd.f32 %v3144, %v3308
      %v3310 = vpop.f32.mrb[0].mxu0
      %v3311 = vpop.f32.mrb[0].mxu0
      %v3312 = vadd.f32 %v3144, %v3311
      %v3313 = vpop.f32.mrb[0].mxu0
      %3314 = vmatprep.mubr.bf16.mxu0 0
      %3315 = vmatmul.mubr.bf16.gmra.mrb[0].mxu0 %v3113
      %v3316 = vpop.f32.mrb[0].mxu0
      %v3317 = vadd.f32 %v3144, %v3316
      %v3318 = vpop.f32.mrb[0].mxu0
      %v3319 = vpop.f32.mrb[0].mxu0
      %v3320 = vadd.f32 %v3144, %v3319
      %v3321 = vpop.f32.mrb[0].mxu0
      %3322 = vmatprep.mubr.bf16.mxu0 0
      %3323 = vmatmul.mubr.bf16.gmra.mrb[0].mxu0 %v3115
      %v3324 = vpop.f32.mrb[0].mxu0
      %v3325 = vadd.f32 %v3144, %v3324
      %v3326 = vpop.f32.mrb[0].mxu0
      %v3327 = vpop.f32.mrb[0].mxu0
      %v3328 = vadd.f32 %v3144, %v3327
      %v3329 = vpop.f32.mrb[0].mxu0
      %3330 = vmatprep.mubr.bf16.mxu0 0
      %3331 = vmatmul.mubr.bf16.gmra.mrb[0].mxu0 %v3117
      %v3332 = vpop.f32.mrb[0].mxu0
      %v3333 = vadd.f32 %v3144, %v3332
      %v3334 = vpop.f32.mrb[0].mxu0
      %v3335 = vpop.f32.mrb[0].mxu0
      %v3336 = vadd.f32 %v3144, %v3335
      %v3337 = vpop.f32.mrb[0].mxu0
      %3338 = vmatprep.mubr.bf16.mxu0 0
      %3339 = vmatmul.mubr.bf16.gmra.mrb[0].mxu0 %v3119
      %v3340 = vpop.f32.mrb[0].mxu0
      %v3341 = vadd.f32 %v3144, %v3340
      %v3342 = vpop.f32.mrb[0].mxu0
      %v3343 = vpop.f32.mrb[0].mxu0
      %v3344 = vadd.f32 %v3144, %v3343
      %v3345 = vpop.f32.mrb[0].mxu0
      %3346 = vmatprep.mubr.bf16.mxu0 0
      %3347 = vmatmul.mubr.bf16.gmra.mrb[0].mxu0 %v3121
      %v3348 = vpop.f32.mrb[0].mxu0
      %v3349 = vadd.f32 %v3144, %v3348
      %v3350 = vpop.f32.mrb[0].mxu0
      %v3351 = vpop.f32.mrb[0].mxu0
      %v3352 = vadd.f32 %v3144, %v3351
      %v3353 = vpop.f32.mrb[0].mxu0
      %3354 = vdwg.mxu0
      %v3355 = vmax.f32 %v3229, 0.0
      %v3356 = vmax.f32 %v3232, 0.0
      %v3357 = vmax.f32 %v3237, 0.0
      %v3358 = vmax.f32 %v3240, 0.0
      %v3359 = vmax.f32 %v3245, 0.0
      %v3360 = vmax.f32 %v3248, 0.0
      %v3361 = vmax.f32 %v3253, 0.0
      %v3362 = vmax.f32 %v3256, 0.0
      %v3363 = vmax.f32 %v3261, 0.0
      %v3364 = vmax.f32 %v3264, 0.0
      %v3365 = vmax.f32 %v3269, 0.0
      %v3366 = vmax.f32 %v3272, 0.0
      %v3367 = vmax.f32 %v3277, 0.0
      %v3368 = vmax.f32 %v3280, 0.0
      %v3369 = vmax.f32 %v3285, 0.0
      %v3370 = vmax.f32 %v3288, 0.0
      %v3371 = vmax.f32 %v3293, 0.0
      %v3372 = vmax.f32 %v3296, 0.0
      %v3373 = vmax.f32 %v3301, 0.0
      %v3374 = vmax.f32 %v3304, 0.0
      %v3375 = vmax.f32 %v3309, 0.0
      %v3376 = vmax.f32 %v3312, 0.0
      %v3377 = vmax.f32 %v3317, 0.0
      %v3378 = vmax.f32 %v3320, 0.0
      %v3379 = vmax.f32 %v3325, 0.0
      %v3380 = vmax.f32 %v3328, 0.0
      %v3381 = vmax.f32 %v3333, 0.0
      %v3382 = vmax.f32 %v3336, 0.0
      %v3383 = vmax.f32 %v3341, 0.0
      %v3384 = vmax.f32 %v3344, 0.0
      %v3385 = vmax.f32 %v3349, 0.0
      %v3386 = vmax.f32 %v3352, 0.0
      %3387 = vst [vmem:[%s170] sm:$0xff] %v3355
      %3388 = vst [vmem:[%s170 + $0x8] sm:$0xff] %v3356
      %3389 = vst [vmem:[%s170 + $0x10] sm:$0xff] %v3357
      %3390 = vst [vmem:[%s170 + $0x18] sm:$0xff] %v3358
      %3391 = vst [vmem:[%s170 + $0x20] sm:$0xff] %v3359
      %3392 = vst [vmem:[%s170 + $0x28] sm:$0xff] %v3360
      %3393 = vst [vmem:[%s170 + $0x30] sm:$0xff] %v3361
      %3394 = vst [vmem:[%s170 + $0x38] sm:$0xff] %v3362
      %3395 = vst [vmem:[%s170 + $0x40] sm:$0xff] %v3363
      %3396 = vst [vmem:[%s170 + $0x48] sm:$0xff] %v3364
      %3397 = vst [vmem:[%s170 + $0x50] sm:$0xff] %v3365
      %3398 = vst [vmem:[%s170 + $0x58] sm:$0xff] %v3366
      %3399 = vst [vmem:[%s170 + $0x60] sm:$0xff] %v3367
      %3400 = vst [vmem:[%s170 + $0x68] sm:$0xff] %v3368
      %3401 = vst [vmem:[%s170 + $0x70] sm:$0xff] %v3369
      %3402 = vst [vmem:[%s170 + $0x78] sm:$0xff] %v3370
      %3403 = vst [vmem:[%s170 + $0x80] sm:$0xff] %v3371
      %3404 = vst [vmem:[%s170 + $0x88] sm:$0xff] %v3372
      %3405 = vst [vmem:[%s170 + $0x90] sm:$0xff] %v3373
      %3406 = vst [vmem:[%s170 + $0x98] sm:$0xff] %v3374
      %3407 = vst [vmem:[%s170 + $0xa0] sm:$0xff] %v3375
      %3408 = vst [vmem:[%s170 + $0xa8] sm:$0xff] %v3376
      %3409 = vst [vmem:[%s170 + $0xb0] sm:$0xff] %v3377
      %3410 = vst [vmem:[%s170 + $0xb8] sm:$0xff] %v3378
      %3411 = vst [vmem:[%s170 + $0xc0] sm:$0xff] %v3379
      %3412 = vst [vmem:[%s170 + $0xc8] sm:$0xff] %v3380
      %3413 = vst [vmem:[%s170 + $0xd0] sm:$0xff] %v3381
      %3414 = vst [vmem:[%s170 + $0xd8] sm:$0xff] %v3382
      %3415 = vst [vmem:[%s170 + $0xe0] sm:$0xff] %v3383
      %3416 = vst [vmem:[%s170 + $0xe8] sm:$0xff] %v3384
      %3417 = vst [vmem:[%s170 + $0xf0] sm:$0xff] %v3385
      %3418 = vst [vmem:[%s170 + $0xf8] sm:$0xff] %v3386
      %p3419 = scmp.lt.s32.totalorder %s14, 1
      %s3420 = scalar_select %p3419, %s14, 1
      %s3421 = smul.addr %s3420, 32
      %s3422 = smul.addr %s3421, 8
      %s3423 = scalar_lea.vmem %s3, %s3422
      // Predicated region
      $region33: #{conv3bn_forward.1} parent=31 // pred_check
        %p3424 = pneg %p100
      $region34: #{conv3bn_forward.1} parent=31 // pred_check_branch
        %3426 = sbr.rel (%p3424) target = $region36
      $region35: #{conv3bn_forward.1} parent=31 // pred_region
        _
      $region36: #{conv3bn_forward.1} parent=31 // pred_fallthru
        _
    $region32: #{conv3bn_forward.1} parent=5 // pred_fallthru
      _
    %p3427 = scmp.le.s32.totalorder 2, %s9
    // Predicated region
    $region37: #{conv3bn_forward.1} parent=5 // pred_check
      %p3428 = pneg %p3427
    $region38: #{conv3bn_forward.1} parent=5 // pred_check_branch
      %3430 = sbr.rel (%p3428) target = $region40
    $region39: #{conv3bn_forward.1} parent=5 // pred_region
      %s3431 = ssub.s32 %s9, 2
      // Predicated region
      $region41: #{conv3bn_forward.1} parent=39 // pred_check
        %p3432 = pneg %p106
      $region42: #{conv3bn_forward.1} parent=39 // pred_check_branch
        %3434 = sbr.rel (%p3432) target = $region44
      $region43: #{conv3bn_forward.1} parent=39 // pred_region
        %p3435 = scmp.lt.s32.totalorder %s15, 1
        %s3436 = scalar_select %p3435, %s15, 1
        %s3437 = smul.addr %s3436, 32
        %s3438 = smul.addr %s3437, 8
        %s3439 = scalar_lea.vmem %s3, %s3438
      $region44: #{conv3bn_forward.1} parent=39 // pred_fallthru
        _
    $region40: #{conv3bn_forward.1} parent=5 // pred_fallthru
      _
  $region6: #{conv3bn_forward.1} parent=0 // loop_footer
    %s13 = sadd.s32 1, %s9
  $region7: #{conv3bn_forward.1} parent=0 // loop_footer_branch
    %8 = sbr.rel target = $region3
  $region8: #{conv3bn_forward.1} parent=0 // loop_exit
    _

</llo_original>
